<compile_context>
chip_gen: v7x
topology: tpu7x:2x2x1
jax: 0.10.0
libtpu: 0.0.40
codegen_flags: <defaults>
</compile_context>

<pallas_src>
import math

import jax
import jax.numpy as jnp
from jax.experimental import pallas as pl
from jax.experimental.pallas import tpu as pltpu


def _round_up(x, m):
    return (x + m - 1) // m * m


def _cdiv(a, b):
    return -(-a // b)


# -----------------------------------------------------------------------------
# Best-effort hardware queries (safe fallbacks so the script always runs).
# -----------------------------------------------------------------------------
def _vmem_capacity_bytes():
    try:
        info = pltpu.get_tpu_info()
        for name in ("vmem_capacity_bytes", "vmem_size_bytes", "vmem_bytes"):
            v = getattr(info, name, None)
            if v:
                return int(v)
    except Exception:
        pass
    try:
        kind = jax.devices()[0].device_kind.lower()
        if ("v4" in kind) or ("v5" in kind) or ("v6" in kind):
            return 128 * 1024 * 1024          # 128 MiB parts
    except Exception:
        pass
    return 64 * 1024 * 1024                   # conservative (v7x physical VMEM)


def _multi_tensorcore_chip():
    # v7x has 2 TensorCores per chip: make sure the ("parallel",) batch axis has
    # at least 2 grid steps there so the second core is not idle.
    try:
        return "7" in jax.devices()[0].device_kind
    except Exception:
        return False


def _batch_tiling(B):
    """Batch tile (bf16-friendly multiple of 16) and padded batch size."""
    Bp0 = _round_up(B, 16)
    ntiles = _cdiv(Bp0, 256)                  # cap the tile at 256 rows (MXU M fill)
    if _multi_tensorcore_chip() and ntiles < 2 and Bp0 > 16:
        ntiles = 2
    TB = _round_up(_cdiv(Bp0, ntiles), 16)
    Bp = _round_up(Bp0, TB)
    return TB, Bp


def _vmem_limit_bytes(TB, Fp, Hp, carries_state):
    Kp = Fp + Hp
    est = 2 * TB * Fp * 2                          # x tile (bf16), double-buffered
    est += 2 * TB * Hp * (2 + 4)                   # h (bf16) + c (f32) input tiles
    est += 2 * TB * Hp * (2 + 4)                   # h_out (bf16) + c_out (f32) tiles
    est += 2 * (Kp * 4 * Hp * 2 + 4 * Hp * 4)      # weights (+bias), worst case 2x buffered
    est += TB * Kp * 2                             # [x|h] bf16 scratch
    if carries_state:
        est += TB * Hp * (2 + 4)                   # carried h/c scratch (sequence kernel)
    cap = _vmem_capacity_bytes()
    return min(max(2 * est, 32 * 1024 * 1024), cap - 16 * 1024 * 1024)


# -----------------------------------------------------------------------------
# Kernels
# -----------------------------------------------------------------------------
def _sigmoid(x):
    # sigmoid(x) = 0.5 * tanh(0.5 * x) + 0.5  : one EUP op + one VPU fma
    return 0.5 * jnp.tanh(0.5 * x) + 0.5


def _gates_to_state(gates, c_prev, Hp):
    # PyTorch LSTMCell gate order along the 4*Hp axis: [i | f | g | o],
    # each gate padded to Hp so every slice is 128-lane aligned.
    i_f = _sigmoid(gates[:, 0:2 * Hp])             # sigmoid over contiguous [i | f]
    g_gate = jnp.tanh(gates[:, 2 * Hp:3 * Hp])
    o_gate = _sigmoid(gates[:, 3 * Hp:4 * Hp])
    c_new = i_f[:, Hp:2 * Hp] * c_prev + i_f[:, 0:Hp] * g_gate    # f32 state update
    h_new = o_gate * jnp.tanh(c_new)
    return h_new, c_new


def _make_step_kernel(fold_bias):
    def kernel(*refs):
        if fold_bias:
            x_ref, h_ref, c_ref, w_ref, h_out_ref, c_out_ref, xh_ref = refs
            b_ref = None
        else:
            x_ref, h_ref, c_ref, w_ref, b_ref, h_out_ref, c_out_ref, xh_ref = refs
        Fp = x_ref.shape[1]
        Hp = h_ref.shape[1]

        # Fused [x | h] LHS in bf16 VMEM scratch; both slices on 128-lane bounds.
        xh_ref[:, 0:Fp] = x_ref[...]
        xh_ref[:, Fp:Fp + Hp] = h_ref[...]

        # One MXU matmul: (TB, Fp+Hp) @ (Fp+Hp, 4*Hp), f32 accumulation.
        gates = jnp.dot(xh_ref[...], w_ref[...], preferred_element_type=jnp.float32)
        if not fold_bias:
            gates = gates + b_ref[...]

        h_new, c_new = _gates_to_state(gates, c_ref[...], Hp)
        h_out_ref[...] = h_new.astype(h_out_ref.dtype)
        c_out_ref[...] = c_new
    return kernel


def _make_seq_kernel(fold_bias):
    def kernel(*refs):
        if fold_bias:
            (x_ref, h0_ref, c0_ref, w_ref,
             h_out_ref, c_out_ref, xh_ref, h_st, c_st) = refs
            b_ref = None
        else:
            (x_ref, h0_ref, c0_ref, w_ref, b_ref,
             h_out_ref, c_out_ref, xh_ref, h_st, c_st) = refs
        Fp = x_ref.shape[1]
        Hp = h0_ref.shape[1]
        t = pl.program_id(1)

        @pl.when(t == 0)
        def _():                                  # load initial state for this batch tile
            h_st[...] = h0_ref[...]
            c_st[...] = c0_ref[...]

        xh_ref[:, 0:Fp] = x_ref[...]
        xh_ref[:, Fp:Fp + Hp] = h_st[...]
        gates = jnp.dot(xh_ref[...], w_ref[...], preferred_element_type=jnp.float32)
        if not fold_bias:
            gates = gates + b_ref[...]

        h_new, c_new = _gates_to_state(gates, c_st[...], Hp)
        h_st[...] = h_new.astype(jnp.bfloat16)    # bf16 recurrent feed
        c_st[...] = c_new                         # f32 cell state carried in VMEM

        @pl.when(t == pl.num_programs(1) - 1)
        def _():
            h_out_ref[...] = h_new.astype(h_out_ref.dtype)
            c_out_ref[...] = c_new
    return kernel


# -----------------------------------------------------------------------------
# Parameter prep (one-time, at init — NOT per step / per sequence)
# -----------------------------------------------------------------------------
def prepare_lstm_params(w_ih, w_hh, b_ih, b_hh):
    """Fuse/transpose/pad PyTorch-layout LSTMCell weights.

    Builds one bf16 (Fp+Hp, 4*Hp) slab: rows 0:F = W_ih^T, rows Fp:Fp+H = W_hh^T,
    each gate block starting on a 128-lane boundary.  If F is not a multiple of
    128, the fused bias (b_ih+b_hh) is folded into the free padding row at K
    index F (the wrapper holds the matching x column at 1.0); otherwise the bias
    is kept as a separate (1, 4*Hp) f32 row added in the kernel.
    """
    fourH, F = w_ih.shape
    H = fourH // 4
    Fp = _round_up(F, 128)
    Hp = _round_up(H, 128)
    fold_bias = Fp > F

    w = jnp.zeros((Fp + Hp, 4 * Hp), jnp.float32)
    b_row = jnp.zeros((1, 4 * Hp), jnp.float32)
    bias = b_ih + b_hh
    for g in range(4):                      # [i | f | g | o]
        w = w.at[0:F, g * Hp:g * Hp + H].set(w_ih[g * H:(g + 1) * H, :].T)
        w = w.at[Fp:Fp + H, g * Hp:g * Hp + H].set(w_hh[g * H:(g + 1) * H, :].T)
        if fold_bias:
            w = w.at[F, g * Hp:g * Hp + H].set(bias[g * H:(g + 1) * H])
        else:
            b_row = b_row.at[0, g * Hp:g * Hp + H].set(bias[g * H:(g + 1) * H])
    return {
        "w": w.astype(jnp.bfloat16),
        "b": None if fold_bias else b_row,
        "dims": (F, H, Fp, Hp),
        "fold_bias": fold_bias,
    }


def _pad_x(x, B, F, Fp, Bp, fold_bias):
    xp = jnp.zeros(x.shape[:-2] + (Bp, Fp), jnp.bfloat16)
    xp = xp.at[..., 0:B, 0:F].set(x.astype(jnp.bfloat16))
    if fold_bias:
        xp = xp.at[..., :, F].set(1.0)      # constant-1 column multiplying the bias row
    return xp


def _pad_state(h, c, B, H, Hp, Bp):
    hp = jnp.zeros((Bp, Hp), jnp.bfloat16).at[0:B, 0:H].set(h.astype(jnp.bfloat16))
    cp = jnp.zeros((Bp, Hp), jnp.float32).at[0:B, 0:H].set(c)
    return hp, cp


# -----------------------------------------------------------------------------
# Single step (== modularLSTM.forward)
# -----------------------------------------------------------------------------
def lstm_cell_prepared(x, h_t, c_t, params):
    F, H, Fp, Hp = params["dims"]
    Kp = Fp + Hp
    fold = params["fold_bias"]
    B = x.shape[0]
    TB, Bp = _batch_tiling(B)

    xp = _pad_x(x, B, F, Fp, Bp, fold)
    hp, cp = _pad_state(h_t, c_t, B, H, Hp, Bp)
    inputs = (xp, hp, cp, params["w"]) if fold else (xp, hp, cp, params["w"], params["b"])
    vmem_limit = _vmem_limit_bytes(TB, Fp, Hp, carries_state=False)

    def run(single_buffer_weights):
        w_kw = {"pipeline_mode": pl.Buffered(1)} if single_buffer_weights else {}
        in_specs = [
            pl.BlockSpec((TB, Fp), lambda b: (b, 0)),               # x tile (bf16)
            pl.BlockSpec((TB, Hp), lambda b: (b, 0)),               # h tile (bf16)
            pl.BlockSpec((TB, Hp), lambda b: (b, 0)),               # c tile (f32)
            pl.BlockSpec((Kp, 4 * Hp), lambda b: (0, 0), **w_kw),   # weights, VMEM-resident
        ]
        if not fold:
            in_specs.append(pl.BlockSpec((1, 4 * Hp), lambda b: (0, 0)))
        return pl.pallas_call(
            _make_step_kernel(fold),
            out_shape=(jax.ShapeDtypeStruct((Bp, Hp), jnp.bfloat16),    # h (bf16 writeback)
                       jax.ShapeDtypeStruct((Bp, Hp), jnp.float32)),    # c (f32)
            grid_spec=pltpu.PrefetchScalarGridSpec(
                num_scalar_prefetch=0,
                grid=(Bp // TB,),
                in_specs=in_specs,
                out_specs=[pl.BlockSpec((TB, Hp), lambda b: (b, 0)),
                           pl.BlockSpec((TB, Hp), lambda b: (b, 0))],
                scratch_shapes=[pltpu.VMEM((TB, Kp), jnp.bfloat16)],
            ),
            compiler_params=pltpu.CompilerParams(
                dimension_semantics=("parallel",),
                vmem_limit_bytes=vmem_limit,
            ),
        )(*inputs)

    try:
        h_pad, c_pad = run(True)        # single-buffer the constant-index weight slab
    except Exception:
        h_pad, c_pad = run(False)       # fallback: default double buffering

    return h_pad[0:B, 0:H].astype(jnp.float32), c_pad[0:B, 0:H]


def lstm_cell(x, h_t, c_t, w_ih, w_hh, b_ih, b_hh):
    """Functional equivalent of modularLSTM.forward(x, h_t, c_t).

    In a recurrent driver, call prepare_lstm_params() once at init and then use
    lstm_cell_prepared() per step — or better, lstm_sequence_prepared() to fuse
    the whole time loop into one pallas_call.
    """
    params = prepare_lstm_params(w_ih, w_hh, b_ih, b_hh)
    return lstm_cell_prepared(x, h_t, c_t, params)


# -----------------------------------------------------------------------------
# Recurrent driver: T steps fused into ONE pallas_call (weights DMA'd once,
# h/c carried in VMEM scratch, pad/unpad once per sequence).
# -----------------------------------------------------------------------------
def lstm_sequence_prepared(x_seq, h0, c0, params):
    F, H, Fp, Hp = params["dims"]
    Kp = Fp + Hp
    fold = params["fold_bias"]
    T, B = x_seq.shape[0], x_seq.shape[1]
    TB, Bp = _batch_tiling(B)

    xs = _pad_x(x_seq, B, F, Fp, Bp, fold)            # (T, Bp, Fp) bf16, padded once
    hp, cp = _pad_state(h0, c0, B, H, Hp, Bp)
    inputs = (xs, hp, cp, params["w"]) if fold else (xs, hp, cp, params["w"], params["b"])
    vmem_limit = _vmem_limit_bytes(TB, Fp, Hp, carries_state=True)

    def run(single_buffer_weights):
        w_kw = {"pipeline_mode": pl.Buffered(1)} if single_buffer_weights else {}
        in_specs = [
            pl.BlockSpec((None, TB, Fp), lambda b, t: (t, b, 0)),       # x_t tile
            pl.BlockSpec((TB, Hp), lambda b, t: (b, 0)),                # h0 tile
            pl.BlockSpec((TB, Hp), lambda b, t: (b, 0)),                # c0 tile
            pl.BlockSpec((Kp, 4 * Hp), lambda b, t: (0, 0), **w_kw),    # weights, resident
        ]
        if not fold:
            in_specs.append(pl.BlockSpec((1, 4 * Hp), lambda b, t: (0, 0)))
        return pl.pallas_call(
            _make_seq_kernel(fold),
            out_shape=(jax.ShapeDtypeStruct((Bp, Hp), jnp.bfloat16),
                       jax.ShapeDtypeStruct((Bp, Hp), jnp.float32)),
            grid_spec=pltpu.PrefetchScalarGridSpec(
                num_scalar_prefetch=0,
                grid=(Bp // TB, T),
                in_specs=in_specs,
                out_specs=[pl.BlockSpec((TB, Hp), lambda b, t: (b, 0)),
                           pl.BlockSpec((TB, Hp), lambda b, t: (b, 0))],
                scratch_shapes=[pltpu.VMEM((TB, Kp), jnp.bfloat16),     # [x|h] LHS
                                pltpu.VMEM((TB, Hp), jnp.bfloat16),     # carried h
                                pltpu.VMEM((TB, Hp), jnp.float32)],     # carried c
            ),
            compiler_params=pltpu.CompilerParams(
                dimension_semantics=("parallel", "arbitrary"),
                vmem_limit_bytes=vmem_limit,
            ),
        )(*inputs)

    try:
        h_pad, c_pad = run(True)
    except Exception:
        h_pad, c_pad = run(False)

    return h_pad[0:B, 0:H].astype(jnp.float32), c_pad[0:B, 0:H]


# -----------------------------------------------------------------------------
# Pure-JAX f32 reference matching torch.nn.LSTMCell
# -----------------------------------------------------------------------------
def _reference_lstm_cell(x, h_t, c_t, w_ih, w_hh, b_ih, b_hh):
    gates = x @ w_ih.T + b_ih + h_t @ w_hh.T + b_hh
    H = h_t.shape[1]
    i = jax.nn.sigmoid(gates[:, 0 * H:1 * H])
    f = jax.nn.sigmoid(gates[:, 1 * H:2 * H])
    g = jnp.tanh(gates[:, 2 * H:3 * H])
    o = jax.nn.sigmoid(gates[:, 3 * H:4 * H])
    c_new = f * c_t + i * g
    h_new = o * jnp.tanh(c_new)
    return h_new, c_new


if __name__ == "__main__":
    # Small deterministic problem: batch=8, feature_size=32, lstm_dim=32, T=6.
    B, F, H, T = 8, 32, 32, 6

    key = jax.random.PRNGKey(0)
    kx, kh, kc, kwi, kwh, kbi, kbh = jax.random.split(key, 7)

    x = jax.random.normal(kx, (B, F), dtype=jnp.float32)
    h_t = jax.random.normal(kh, (B, H), dtype=jnp.float32)
    c_t = jax.random.normal(kc, (B, H), dtype=jnp.float32)
    x_seq = jax.random.normal(jax.random.fold_in(key, 1), (T, B, F), dtype=jnp.float32)

    # PyTorch LSTMCell init: U(-1/sqrt(H), 1/sqrt(H)) for all params.
    bound = 1.0 / math.sqrt(H)
    w_ih = jax.random.uniform(kwi, (4 * H, F), jnp.float32, -bound, bound)
    w_hh = jax.random.uniform(kwh, (4 * H, H), jnp.float32, -bound, bound)
    b_ih = jax.random.uniform(kbi, (4 * H,), jnp.float32, -bound, bound)
    b_hh = jax.random.uniform(kbh, (4 * H,), jnp.float32, -bound, bound)

    # One-time parameter fusion (init-time; reused across steps / sequences).
    params = prepare_lstm_params(w_ih, w_hh, b_ih, b_hh)

    # --- single step: modularLSTM.forward(x, h_t, c_t) -------------------------
    h1, c1 = lstm_cell_prepared(x, h_t, c_t, params)
    jax.block_until_ready((h1, c1))
    h1_ref, c1_ref = _reference_lstm_cell(x, h_t, c_t, w_ih, w_hh, b_ih, b_hh)
    assert h1.shape == (B, H) and c1.shape == (B, H)
    assert jnp.allclose(h1, h1_ref, atol=3e-2, rtol=3e-2)
    assert jnp.allclose(c1, c1_ref, atol=3e-2, rtol=3e-2)

    # --- recurrent driver: T steps fused into one pallas_call ------------------
    hT, cT = lstm_sequence_prepared(x_seq, h_t, c_t, params)
    jax.block_until_ready((hT, cT))
    hr, cr = h_t, c_t
    for t in range(T):
        hr, cr = _reference_lstm_cell(x_seq[t], hr, cr, w_ih, w_hh, b_ih, b_hh)
    assert hT.shape == (B, H) and cT.shape == (B, H)
    assert jnp.allclose(hT, hr, atol=6e-2, rtol=6e-2)
    assert jnp.allclose(cT, cr, atol=6e-2, rtol=6e-2)

    print("KERNEL_OK")
</pallas_src>

<mosaic_0001>
module attributes {stable_mosaic.version = 11 : i64} {
  func.func @kernel(%arg0: i32, %arg1: memref<16x128xbf16, #tpu.memory_space<vmem>>, %arg2: memref<16x128xbf16, #tpu.memory_space<vmem>>, %arg3: memref<16x128xf32, #tpu.memory_space<vmem>>, %arg4: memref<256x512xbf16, #tpu.memory_space<vmem>>, %arg5: memref<16x128xbf16, #tpu.memory_space<vmem>>, %arg6: memref<16x128xf32, #tpu.memory_space<vmem>>, %arg7: memref<16x256xbf16, #tpu.memory_space<vmem>>) attributes {dimension_semantics = [#tpu.dimension_semantics<parallel>], iteration_bounds = array<i64: 1>, scalar_prefetch = 0 : i64, scratch_operands = 1 : i64, tpu.core_type = #tpu.core_type<tc>, window_params = [{transform_indices = @transform_0, window_bounds = array<i64: 16, 128>}, {transform_indices = @transform_1, window_bounds = array<i64: 16, 128>}, {transform_indices = @transform_2, window_bounds = array<i64: 16, 128>}, {pipeline_mode = #tpu.pipeline_mode<synchronous>, transform_indices = @transform_3, window_bounds = array<i64: 256, 512>}, {transform_indices = @transform_4, window_bounds = array<i64: 16, 128>}, {transform_indices = @transform_5, window_bounds = array<i64: 16, 128>}]} {
    %c0 = arith.constant 0 : index
    %c0_0 = arith.constant 0 : index
    %0 = vector.load %arg1[%c0, %c0_0] : memref<16x128xbf16, #tpu.memory_space<vmem>>, vector<16x128xbf16>
    %c0_1 = arith.constant 0 : index
    %c0_2 = arith.constant 0 : index
    %1 = vector.load %arg7[%c0_1, %c0_2] : memref<16x256xbf16, #tpu.memory_space<vmem>>, vector<16x128xbf16>
    tpu.vector_store %arg7[%c0_1, %c0_2], %0 {strides = array<i32>} : memref<16x256xbf16, #tpu.memory_space<vmem>>, vector<16x128xbf16>,
    %c0_3 = arith.constant 0 : index
    %c0_4 = arith.constant 0 : index
    %2 = vector.load %arg2[%c0_3, %c0_4] : memref<16x128xbf16, #tpu.memory_space<vmem>>, vector<16x128xbf16>
    %c0_5 = arith.constant 0 : index
    %c128 = arith.constant 128 : index
    %3 = vector.load %arg7[%c0_5, %c128] : memref<16x256xbf16, #tpu.memory_space<vmem>>, vector<16x128xbf16>
    tpu.vector_store %arg7[%c0_5, %c128], %2 {strides = array<i32>} : memref<16x256xbf16, #tpu.memory_space<vmem>>, vector<16x128xbf16>,
    %c0_6 = arith.constant 0 : index
    %c0_7 = arith.constant 0 : index
    %4 = vector.load %arg7[%c0_6, %c0_7] : memref<16x256xbf16, #tpu.memory_space<vmem>>, vector<16x256xbf16>
    %c0_8 = arith.constant 0 : index
    %c0_9 = arith.constant 0 : index
    %5 = vector.load %arg4[%c0_8, %c0_9] : memref<256x512xbf16, #tpu.memory_space<vmem>>, vector<256x512xbf16>
    %cst = arith.constant dense<0.000000e+00> : vector<16x512xf32>
    %6 = tpu.matmul %4, %5, %cst {dimension_numbers = #tpu.dot_dimension_numbers<[1], [0], [0], [1], [0, 0, 1, 1], [], []>} : vector<16x256xbf16>, vector<256x512xbf16>, vector<16x512xf32> -> vector<16x512xf32>
    %c0_10 = arith.constant 0 : index
    %c0_11 = arith.constant 0 : index
    %7 = vector.load %arg3[%c0_10, %c0_11] : memref<16x128xf32, #tpu.memory_space<vmem>>, vector<16x128xf32>
    %8 = vector.extract_strided_slice %6 {offsets = [0, 0], sizes = [16, 256], strides = [1, 1]} : vector<16x512xf32> to vector<16x256xf32>
    %cst_12 = arith.constant 5.000000e-01 : f32
    %9 = vector.broadcast %cst_12 : f32 to vector<16x256xf32>
    %10 = arith.mulf %9, %8 : vector<16x256xf32>
    %11 = math.tanh %10 : vector<16x256xf32>
    %cst_13 = arith.constant 5.000000e-01 : f32
    %12 = vector.broadcast %cst_13 : f32 to vector<16x256xf32>
    %13 = arith.mulf %12, %11 : vector<16x256xf32>
    %cst_14 = arith.constant 5.000000e-01 : f32
    %14 = vector.broadcast %cst_14 : f32 to vector<16x256xf32>
    %15 = arith.addf %13, %14 : vector<16x256xf32>
    %16 = vector.extract_strided_slice %6 {offsets = [0, 256], sizes = [16, 128], strides = [1, 1]} : vector<16x512xf32> to vector<16x128xf32>
    %17 = math.tanh %16 : vector<16x128xf32>
    %18 = vector.extract_strided_slice %6 {offsets = [0, 384], sizes = [16, 128], strides = [1, 1]} : vector<16x512xf32> to vector<16x128xf32>
    %cst_15 = arith.constant 5.000000e-01 : f32
    %19 = vector.broadcast %cst_15 : f32 to vector<16x128xf32>
    %20 = arith.mulf %19, %18 : vector<16x128xf32>
    %21 = math.tanh %20 : vector<16x128xf32>
    %cst_16 = arith.constant 5.000000e-01 : f32
    %22 = vector.broadcast %cst_16 : f32 to vector<16x128xf32>
    %23 = arith.mulf %22, %21 : vector<16x128xf32>
    %cst_17 = arith.constant 5.000000e-01 : f32
    %24 = vector.broadcast %cst_17 : f32 to vector<16x128xf32>
    %25 = arith.addf %23, %24 : vector<16x128xf32>
    %26 = vector.extract_strided_slice %15 {offsets = [0, 128], sizes = [16, 128], strides = [1, 1]} : vector<16x256xf32> to vector<16x128xf32>
    %27 = arith.mulf %26, %7 : vector<16x128xf32>
    %28 = vector.extract_strided_slice %15 {offsets = [0, 0], sizes = [16, 128], strides = [1, 1]} : vector<16x256xf32> to vector<16x128xf32>
    %29 = arith.mulf %28, %17 : vector<16x128xf32>
    %30 = arith.addf %27, %29 : vector<16x128xf32>
    %31 = math.tanh %30 : vector<16x128xf32>
    %32 = arith.mulf %25, %31 : vector<16x128xf32>
    %33 = arith.truncf %32 : vector<16x128xf32> to vector<16x128xbf16>
    %c0_18 = arith.constant 0 : index
    %c0_19 = arith.constant 0 : index
    %34 = vector.load %arg5[%c0_18, %c0_19] : memref<16x128xbf16, #tpu.memory_space<vmem>>, vector<16x128xbf16>
    tpu.vector_store %arg5[%c0_18, %c0_19], %33 {strides = array<i32>} : memref<16x128xbf16, #tpu.memory_space<vmem>>, vector<16x128xbf16>,
    %c0_20 = arith.constant 0 : index
    %c0_21 = arith.constant 0 : index
    %35 = vector.load %arg6[%c0_20, %c0_21] : memref<16x128xf32, #tpu.memory_space<vmem>>, vector<16x128xf32>
    tpu.vector_store %arg6[%c0_20, %c0_21], %30 {strides = array<i32>} : memref<16x128xf32, #tpu.memory_space<vmem>>, vector<16x128xf32>,
    return
  }
  func.func @transform_0(%arg0: i32) -> (i32, i32) {
    %c0_i32 = arith.constant 0 : i32
    %c0_i32_0 = arith.constant 0 : i32
    return %arg0, %c0_i32 : i32, i32
  }
  func.func @transform_1(%arg0: i32) -> (i32, i32) {
    %c0_i32 = arith.constant 0 : i32
    %c0_i32_0 = arith.constant 0 : i32
    return %arg0, %c0_i32 : i32, i32
  }
  func.func @transform_2(%arg0: i32) -> (i32, i32) {
    %c0_i32 = arith.constant 0 : i32
    %c0_i32_0 = arith.constant 0 : i32
    return %arg0, %c0_i32 : i32, i32
  }
  func.func @transform_3(%arg0: i32) -> (i32, i32) {
    %c0_i32 = arith.constant 0 : i32
    %c0_i32_0 = arith.constant 0 : i32
    %c0_i32_1 = arith.constant 0 : i32
    return %c0_i32, %c0_i32_0 : i32, i32
  }
  func.func @transform_4(%arg0: i32) -> (i32, i32) {
    %c0_i32 = arith.constant 0 : i32
    %c0_i32_0 = arith.constant 0 : i32
    return %arg0, %c0_i32 : i32, i32
  }
  func.func @transform_5(%arg0: i32) -> (i32, i32) {
    %c0_i32 = arith.constant 0 : i32
    %c0_i32_0 = arith.constant 0 : i32
    return %arg0, %c0_i32 : i32, i32
  }
}

module attributes {stable_mosaic.version = 11 : i64} {
  func.func @kernel(%arg0: i32, %arg1: memref<16x128xbf16, #tpu.memory_space<vmem>>, %arg2: memref<16x128xbf16, #tpu.memory_space<vmem>>, %arg3: memref<16x128xf32, #tpu.memory_space<vmem>>, %arg4: memref<256x512xbf16, #tpu.memory_space<vmem>>, %arg5: memref<16x128xbf16, #tpu.memory_space<vmem>>, %arg6: memref<16x128xf32, #tpu.memory_space<vmem>>, %arg7: memref<16x256xbf16, #tpu.memory_space<vmem>>) attributes {dimension_semantics = [#tpu.dimension_semantics<parallel>], iteration_bounds = array<i64: 1>, scalar_prefetch = 0 : i64, scratch_operands = 1 : i64, tpu.core_type = #tpu.core_type<tc>, window_params = [{transform_indices = @transform_0, window_bounds = array<i64: 16, 128>}, {transform_indices = @transform_1, window_bounds = array<i64: 16, 128>}, {transform_indices = @transform_2, window_bounds = array<i64: 16, 128>}, {pipeline_mode = #tpu.pipeline_mode<synchronous>, transform_indices = @transform_3, window_bounds = array<i64: 256, 512>}, {transform_indices = @transform_4, window_bounds = array<i64: 16, 128>}, {transform_indices = @transform_5, window_bounds = array<i64: 16, 128>}]} {
    %c0 = arith.constant 0 : index
    %c0_0 = arith.constant 0 : index
    %0 = vector.load %arg1[%c0, %c0_0] : memref<16x128xbf16, #tpu.memory_space<vmem>>, vector<16x128xbf16>
    %c0_1 = arith.constant 0 : index
    %c0_2 = arith.constant 0 : index
    %1 = vector.load %arg7[%c0_1, %c0_2] : memref<16x256xbf16, #tpu.memory_space<vmem>>, vector<16x128xbf16>
    tpu.vector_store %arg7[%c0_1, %c0_2], %0 {strides = array<i32>} : memref<16x256xbf16, #tpu.memory_space<vmem>>, vector<16x128xbf16>,
    %c0_3 = arith.constant 0 : index
    %c0_4 = arith.constant 0 : index
    %2 = vector.load %arg2[%c0_3, %c0_4] : memref<16x128xbf16, #tpu.memory_space<vmem>>, vector<16x128xbf16>
    %c0_5 = arith.constant 0 : index
    %c128 = arith.constant 128 : index
    %3 = vector.load %arg7[%c0_5, %c128] : memref<16x256xbf16, #tpu.memory_space<vmem>>, vector<16x128xbf16>
    tpu.vector_store %arg7[%c0_5, %c128], %2 {strides = array<i32>} : memref<16x256xbf16, #tpu.memory_space<vmem>>, vector<16x128xbf16>,
    %c0_6 = arith.constant 0 : index
    %c0_7 = arith.constant 0 : index
    %4 = vector.load %arg7[%c0_6, %c0_7] : memref<16x256xbf16, #tpu.memory_space<vmem>>, vector<16x256xbf16>
    %c0_8 = arith.constant 0 : index
    %c0_9 = arith.constant 0 : index
    %5 = vector.load %arg4[%c0_8, %c0_9] : memref<256x512xbf16, #tpu.memory_space<vmem>>, vector<256x512xbf16>
    %cst = arith.constant dense<0.000000e+00> : vector<16x512xf32>
    %6 = tpu.matmul %4, %5, %cst {dimension_numbers = #tpu.dot_dimension_numbers<[1], [0], [0], [1], [0, 0, 1, 1], [], []>} : vector<16x256xbf16>, vector<256x512xbf16>, vector<16x512xf32> -> vector<16x512xf32>
    %c0_10 = arith.constant 0 : index
    %c0_11 = arith.constant 0 : index
    %7 = vector.load %arg3[%c0_10, %c0_11] : memref<16x128xf32, #tpu.memory_space<vmem>>, vector<16x128xf32>
    %8 = vector.extract_strided_slice %6 {offsets = [0, 0], sizes = [16, 256], strides = [1, 1]} : vector<16x512xf32> to vector<16x256xf32>
    %cst_12 = arith.constant 5.000000e-01 : f32
    %9 = vector.broadcast %cst_12 : f32 to vector<16x256xf32>
    %10 = arith.mulf %9, %8 : vector<16x256xf32>
    %11 = math.tanh %10 : vector<16x256xf32>
    %cst_13 = arith.constant 5.000000e-01 : f32
    %12 = vector.broadcast %cst_13 : f32 to vector<16x256xf32>
    %13 = arith.mulf %12, %11 : vector<16x256xf32>
    %cst_14 = arith.constant 5.000000e-01 : f32
    %14 = vector.broadcast %cst_14 : f32 to vector<16x256xf32>
    %15 = arith.addf %13, %14 : vector<16x256xf32>
    %16 = vector.extract_strided_slice %6 {offsets = [0, 256], sizes = [16, 128], strides = [1, 1]} : vector<16x512xf32> to vector<16x128xf32>
    %17 = math.tanh %16 : vector<16x128xf32>
    %18 = vector.extract_strided_slice %6 {offsets = [0, 384], sizes = [16, 128], strides = [1, 1]} : vector<16x512xf32> to vector<16x128xf32>
    %cst_15 = arith.constant 5.000000e-01 : f32
    %19 = vector.broadcast %cst_15 : f32 to vector<16x128xf32>
    %20 = arith.mulf %19, %18 : vector<16x128xf32>
    %21 = math.tanh %20 : vector<16x128xf32>
    %cst_16 = arith.constant 5.000000e-01 : f32
    %22 = vector.broadcast %cst_16 : f32 to vector<16x128xf32>
    %23 = arith.mulf %22, %21 : vector<16x128xf32>
    %cst_17 = arith.constant 5.000000e-01 : f32
    %24 = vector.broadcast %cst_17 : f32 to vector<16x128xf32>
    %25 = arith.addf %23, %24 : vector<16x128xf32>
    %26 = vector.extract_strided_slice %15 {offsets = [0, 128], sizes = [16, 128], strides = [1, 1]} : vector<16x256xf32> to vector<16x128xf32>
    %27 = arith.mulf %26, %7 : vector<16x128xf32>
    %28 = vector.extract_strided_slice %15 {offsets = [0, 0], sizes = [16, 128], strides = [1, 1]} : vector<16x256xf32> to vector<16x128xf32>
    %29 = arith.mulf %28, %17 : vector<16x128xf32>
    %30 = arith.addf %27, %29 : vector<16x128xf32>
    %31 = math.tanh %30 : vector<16x128xf32>
    %32 = arith.mulf %25, %31 : vector<16x128xf32>
    %33 = arith.truncf %32 : vector<16x128xf32> to vector<16x128xbf16>
    %c0_18 = arith.constant 0 : index
    %c0_19 = arith.constant 0 : index
    %34 = vector.load %arg5[%c0_18, %c0_19] : memref<16x128xbf16, #tpu.memory_space<vmem>>, vector<16x128xbf16>
    tpu.vector_store %arg5[%c0_18, %c0_19], %33 {strides = array<i32>} : memref<16x128xbf16, #tpu.memory_space<vmem>>, vector<16x128xbf16>,
    %c0_20 = arith.constant 0 : index
    %c0_21 = arith.constant 0 : index
    %35 = vector.load %arg6[%c0_20, %c0_21] : memref<16x128xf32, #tpu.memory_space<vmem>>, vector<16x128xf32>
    tpu.vector_store %arg6[%c0_20, %c0_21], %30 {strides = array<i32>} : memref<16x128xf32, #tpu.memory_space<vmem>>, vector<16x128xf32>,
    return
  }
  func.func @transform_0(%arg0: i32) -> (i32, i32) {
    %c0_i32 = arith.constant 0 : i32
    %c0_i32_0 = arith.constant 0 : i32
    return %arg0, %c0_i32 : i32, i32
  }
  func.func @transform_1(%arg0: i32) -> (i32, i32) {
    %c0_i32 = arith.constant 0 : i32
    %c0_i32_0 = arith.constant 0 : i32
    return %arg0, %c0_i32 : i32, i32
  }
  func.func @transform_2(%arg0: i32) -> (i32, i32) {
    %c0_i32 = arith.constant 0 : i32
    %c0_i32_0 = arith.constant 0 : i32
    return %arg0, %c0_i32 : i32, i32
  }
  func.func @transform_3(%arg0: i32) -> (i32, i32) {
    %c0_i32 = arith.constant 0 : i32
    %c0_i32_0 = arith.constant 0 : i32
    %c0_i32_1 = arith.constant 0 : i32
    return %c0_i32, %c0_i32_0 : i32, i32
  }
  func.func @transform_4(%arg0: i32) -> (i32, i32) {
    %c0_i32 = arith.constant 0 : i32
    %c0_i32_0 = arith.constant 0 : i32
    return %arg0, %c0_i32 : i32, i32
  }
  func.func @transform_5(%arg0: i32) -> (i32, i32) {
    %c0_i32 = arith.constant 0 : i32
    %c0_i32_0 = arith.constant 0 : i32
    return %arg0, %c0_i32 : i32, i32
  }
}

</mosaic_0001>

<llo_original>
// kernel: tpu_custom_call.1
$region0: #{tpu_custom_call.1}
  #allocation0 [shape = 'u32[]', space=smem, size = 0x4, offset = 0x4, fixed_abs, tag = 'smem constant byte address 0x4 - core index']
  #allocation1 [shape = 'u32[144,128]{1,0:T(1,128)}', space=vmem, size = 0x12000, scoped, tag = 'internal scratch']
  #allocation2 [shape = 'bf16[16,256]{1,0:T(16,128)(2,1)}', space=vmem, size = 0x2000, scoped, tag = 'scratch operand']
  %s0 = inlined_call_operand.hbm [shape: bf16[16,128], index: 0, kind: input, shape index: {}]
  %s1 = inlined_call_operand.hbm [shape: bf16[16,128], index: 1, kind: input, shape index: {}]
  %s2 = inlined_call_operand.hbm [shape: f32[16,128], index: 2, kind: input, shape index: {}]
  %s3 = inlined_call_operand.hbm [shape: bf16[256,512], index: 3, kind: input, shape index: {}]
  %s4 = inlined_call_operand.hbm [shape: bf16[16,128], index: 4, kind: output, shape index: {0}]
  %s5 = inlined_call_operand.hbm [shape: f32[16,128], index: 5, kind: output, shape index: {1}]
  %6 = xla_tuple %s4, %s5
  %s7 = sld [smem:[#allocation0]]
  $region50: #{tpu_custom_call.1} parent=0
    _
  %s9 = ssub.s32 1, %s7
  %s10 = scalar_select 0, %s9, %s7
  $region1: #{tpu_custom_call.1} parent=0
    #allocation3 [shape = 'u8[4096]{0}', space=vmem, size = 0x1000, scoped, tag = 'input window, operand 0, single buffered']
    #allocation4 [shape = 's32[1]{0}', space=sflag, size = 0x4, scoped, tag = 'scoped memory for tpu_custom_call.1']
    #allocation5 [shape = 's32[1]{0}', space=sflag, size = 0x4, scoped, tag = 'scoped memory for tpu_custom_call.1']
    #allocation6 [shape = 'u8[4096]{0}', space=vmem, size = 0x1000, scoped, tag = 'input window, operand 1, single buffered']
    #allocation7 [shape = 's32[1]{0}', space=sflag, size = 0x4, scoped, tag = 'scoped memory for tpu_custom_call.1']
    #allocation8 [shape = 'u8[8192]{0}', space=vmem, size = 0x2000, scoped, tag = 'input window, operand 2, single buffered']
    #allocation9 [shape = 'u8[262144]{0}', space=vmem, size = 0x40000, scoped, tag = 'input window, operand 3, single buffered']
    #allocation10 [shape = 's32[1]{0}', space=sflag, size = 0x4, scoped, tag = 'scoped memory for tpu_custom_call.1']
    #allocation11 [shape = 'u8[4096]{0}', space=vmem, size = 0x1000, scoped, tag = 'output window, operand 0, single buffered']
    #allocation12 [shape = 'u8[8192]{0}', space=vmem, size = 0x2000, scoped, tag = 'output window, operand 1, single buffered']
    #allocation13 [shape = 's32[1]{0}', space=sflag, size = 0x4, scoped, tag = 'scoped memory for tpu_custom_call.1']
    %11 = vsyncpa [#allocation4], 0
    %12 = vsyncpa [#allocation7], 0
    %13 = vsyncpa [#allocation10], 0
    %14 = vsyncpa [#allocation5], 0
    %15 = vsyncpa [#allocation13], 0
    // Predicated region
    $region2: #{tpu_custom_call.1} parent=1 // pred_check
      _
    $region3: #{tpu_custom_call.1} parent=1 // pred_check_branch
      %17 = sbr.rel (0) target = $region5
    $region4: #{tpu_custom_call.1} parent=1 // pred_region
      %s19 = ssub.s32 128, 128
      %20 = vsyncadd [#allocation4], %s19
      %s21 = sshll.u32 [#allocation3], 4
      %s22 = int_to_ptr.vmem [resolvable:$true] %s21
      %27 = dma.hbm_to_vmem [thread:$0]  %s0, 128, %s22, [#allocation4], 64, 64, 4
    $region5: #{tpu_custom_call.1} parent=1 // pred_fallthru
      _
    // Predicated region
    $region6: #{tpu_custom_call.1} parent=1 // pred_check
      _
    $region7: #{tpu_custom_call.1} parent=1 // pred_check_branch
      %29 = sbr.rel (0) target = $region9
    $region8: #{tpu_custom_call.1} parent=1 // pred_region
      %s31 = ssub.s32 128, 128
      %32 = vsyncadd [#allocation7], %s31
      %s33 = sshll.u32 [#allocation6], 4
      %s34 = int_to_ptr.vmem [resolvable:$true] %s33
      %39 = dma.hbm_to_vmem [thread:$0]  %s1, 128, %s34, [#allocation7], 64, 64, 4
    $region9: #{tpu_custom_call.1} parent=1 // pred_fallthru
      _
    // Predicated region
    $region10: #{tpu_custom_call.1} parent=1 // pred_check
      _
    $region11: #{tpu_custom_call.1} parent=1 // pred_check_branch
      %41 = sbr.rel (0) target = $region13
    $region12: #{tpu_custom_call.1} parent=1 // pred_region
      %s43 = ssub.s32 256, 256
      %44 = vsyncadd [#allocation7], %s43
      %s45 = sshll.u32 [#allocation8], 4
      %s46 = int_to_ptr.vmem [resolvable:$true] %s45
      %51 = dma.hbm_to_vmem [thread:$0]  %s2, 256, %s46, [#allocation7], 128, 128, 8
    $region13: #{tpu_custom_call.1} parent=1 // pred_fallthru
      _
    // Predicated region
    $region14: #{tpu_custom_call.1} parent=1 // pred_check
      _
    $region15: #{tpu_custom_call.1} parent=1 // pred_check_branch
      %53 = sbr.rel (0) target = $region17
    $region16: #{tpu_custom_call.1} parent=1 // pred_region
      %s55 = ssub.s32 8192, 8192
      %56 = vsyncadd [#allocation10], %s55
      %s57 = sshll.u32 [#allocation9], 4
      %s58 = int_to_ptr.vmem [resolvable:$true] %s57
      %63 = dma.hbm_to_vmem [thread:$0]  %s3, 8192, %s58, [#allocation10], 256, 256, 16
    $region17: #{tpu_custom_call.1} parent=1 // pred_fallthru
      _
    // Predicated region
    $region18: #{tpu_custom_call.1} parent=1 // pred_check
      _
    $region19: #{tpu_custom_call.1} parent=1 // pred_check_branch
      %65 = sbr.rel (0) target = $region21
    $region20: #{tpu_custom_call.1} parent=1 // pred_region
      %66 = dma.done [#allocation4], 128
    $region21: #{tpu_custom_call.1} parent=1 // pred_fallthru
      _
    // Predicated region
    $region22: #{tpu_custom_call.1} parent=1 // pred_check
      _
    $region23: #{tpu_custom_call.1} parent=1 // pred_check_branch
      %68 = sbr.rel (0) target = $region25
    $region24: #{tpu_custom_call.1} parent=1 // pred_region
      %69 = dma.done [#allocation7], 128
    $region25: #{tpu_custom_call.1} parent=1 // pred_fallthru
      _
    // Predicated region
    $region26: #{tpu_custom_call.1} parent=1 // pred_check
      _
    $region27: #{tpu_custom_call.1} parent=1 // pred_check_branch
      %71 = sbr.rel (0) target = $region29
    $region28: #{tpu_custom_call.1} parent=1 // pred_region
      %72 = dma.done [#allocation7], 256
    $region29: #{tpu_custom_call.1} parent=1 // pred_fallthru
      _
    // Predicated region
    $region30: #{tpu_custom_call.1} parent=1 // pred_check
      _
    $region31: #{tpu_custom_call.1} parent=1 // pred_check_branch
      %74 = sbr.rel (0) target = $region33
    $region32: #{tpu_custom_call.1} parent=1 // pred_region
      %75 = dma.done [#allocation10], 8192
    $region33: #{tpu_custom_call.1} parent=1 // pred_fallthru
      _
    %v76 = vld [vmem:[#allocation3] sm:$0xf]
    %v77 = vld [vmem:[#allocation3 + $0x4] sm:$0xf]
    %v80 = vunpack.c.l.b16 %v76
    %v81 = vunpack.c.l.b16 %v77
    %v82 = vpack.c.b16 %v81, %v80
    %84 = vst [vmem:[#allocation2] sm:$0xff] %v82
    %v85 = vld [vmem:[#allocation6] sm:$0xf]
    %v86 = vld [vmem:[#allocation6 + $0x4] sm:$0xf]
    %v89 = vunpack.c.l.b16 %v85
    %v90 = vunpack.c.l.b16 %v86
    %v91 = vpack.c.b16 %v90, %v89
    %93 = vst [vmem:[#allocation2 + $0x8] sm:$0xff] %v91
    %v94 = vld [vmem:[#allocation2] sm:$0xff]
    %v95 = vld [vmem:[#allocation2 + $0x8] sm:$0xff]
    %v96 = vld [vmem:[#allocation9] sm:$0xff]
    %v97 = vld [vmem:[#allocation9 + $0x8] sm:$0xff]
    %v98 = vld [vmem:[#allocation9 + $0x10] sm:$0xff]
    %v99 = vld [vmem:[#allocation9 + $0x18] sm:$0xff]
    %v100 = vld [vmem:[#allocation9 + $0x20] sm:$0xff]
    %v101 = vld [vmem:[#allocation9 + $0x28] sm:$0xff]
    %v102 = vld [vmem:[#allocation9 + $0x30] sm:$0xff]
    %v103 = vld [vmem:[#allocation9 + $0x38] sm:$0xff]
    %v104 = vld [vmem:[#allocation9 + $0x40] sm:$0xff]
    %v105 = vld [vmem:[#allocation9 + $0x48] sm:$0xff]
    %v106 = vld [vmem:[#allocation9 + $0x50] sm:$0xff]
    %v107 = vld [vmem:[#allocation9 + $0x58] sm:$0xff]
    %v108 = vld [vmem:[#allocation9 + $0x60] sm:$0xff]
    %v109 = vld [vmem:[#allocation9 + $0x68] sm:$0xff]
    %v110 = vld [vmem:[#allocation9 + $0x70] sm:$0xff]
    %v111 = vld [vmem:[#allocation9 + $0x78] sm:$0xff]
    %v112 = vld [vmem:[#allocation9 + $0x80] sm:$0xff]
    %v113 = vld [vmem:[#allocation9 + $0x88] sm:$0xff]
    %v114 = vld [vmem:[#allocation9 + $0x90] sm:$0xff]
    %v115 = vld [vmem:[#allocation9 + $0x98] sm:$0xff]
    %v116 = vld [vmem:[#allocation9 + $0xa0] sm:$0xff]
    %v117 = vld [vmem:[#allocation9 + $0xa8] sm:$0xff]
    %v118 = vld [vmem:[#allocation9 + $0xb0] sm:$0xff]
    %v119 = vld [vmem:[#allocation9 + $0xb8] sm:$0xff]
    %v120 = vld [vmem:[#allocation9 + $0xc0] sm:$0xff]
    %v121 = vld [vmem:[#allocation9 + $0xc8] sm:$0xff]
    %v122 = vld [vmem:[#allocation9 + $0xd0] sm:$0xff]
    %v123 = vld [vmem:[#allocation9 + $0xd8] sm:$0xff]
    %v124 = vld [vmem:[#allocation9 + $0xe0] sm:$0xff]
    %v125 = vld [vmem:[#allocation9 + $0xe8] sm:$0xff]
    %v126 = vld [vmem:[#allocation9 + $0xf0] sm:$0xff]
    %v127 = vld [vmem:[#allocation9 + $0xf8] sm:$0xff]
    %v128 = vld [vmem:[#allocation9 + $0x100] sm:$0xff]
    %v129 = vld [vmem:[#allocation9 + $0x108] sm:$0xff]
    %v130 = vld [vmem:[#allocation9 + $0x110] sm:$0xff]
    %v131 = vld [vmem:[#allocation9 + $0x118] sm:$0xff]
    %v132 = vld [vmem:[#allocation9 + $0x120] sm:$0xff]
    %v133 = vld [vmem:[#allocation9 + $0x128] sm:$0xff]
    %v134 = vld [vmem:[#allocation9 + $0x130] sm:$0xff]
    %v135 = vld [vmem:[#allocation9 + $0x138] sm:$0xff]
    %v136 = vld [vmem:[#allocation9 + $0x140] sm:$0xff]
    %v137 = vld [vmem:[#allocation9 + $0x148] sm:$0xff]
    %v138 = vld [vmem:[#allocation9 + $0x150] sm:$0xff]
    %v139 = vld [vmem:[#allocation9 + $0x158] sm:$0xff]
    %v140 = vld [vmem:[#allocation9 + $0x160] sm:$0xff]
    %v141 = vld [vmem:[#allocation9 + $0x168] sm:$0xff]
    %v142 = vld [vmem:[#allocation9 + $0x170] sm:$0xff]
    %v143 = vld [vmem:[#allocation9 + $0x178] sm:$0xff]
    %v144 = vld [vmem:[#allocation9 + $0x180] sm:$0xff]
    %v145 = vld [vmem:[#allocation9 + $0x188] sm:$0xff]
    %v146 = vld [vmem:[#allocation9 + $0x190] sm:$0xff]
    %v147 = vld [vmem:[#allocation9 + $0x198] sm:$0xff]
    %v148 = vld [vmem:[#allocation9 + $0x1a0] sm:$0xff]
    %v149 = vld [vmem:[#allocation9 + $0x1a8] sm:$0xff]
    %v150 = vld [vmem:[#allocation9 + $0x1b0] sm:$0xff]
    %v151 = vld [vmem:[#allocation9 + $0x1b8] sm:$0xff]
    %v152 = vld [vmem:[#allocation9 + $0x1c0] sm:$0xff]
    %v153 = vld [vmem:[#allocation9 + $0x1c8] sm:$0xff]
    %v154 = vld [vmem:[#allocation9 + $0x1d0] sm:$0xff]
    %v155 = vld [vmem:[#allocation9 + $0x1d8] sm:$0xff]
    %v156 = vld [vmem:[#allocation9 + $0x1e0] sm:$0xff]
    %v157 = vld [vmem:[#allocation9 + $0x1e8] sm:$0xff]
    %v158 = vld [vmem:[#allocation9 + $0x1f0] sm:$0xff]
    %v159 = vld [vmem:[#allocation9 + $0x1f8] sm:$0xff]
    %v224 = vunpack.c.l.b16 %v96
    %v225 = vunpack.c.h.b16 %v96
    %v226 = vunpack.c.l.b16 %v97
    %v227 = vunpack.c.h.b16 %v97
    %v228 = vunpack.c.l.b16 %v98
    %v229 = vunpack.c.h.b16 %v98
    %v230 = vunpack.c.l.b16 %v99
    %v231 = vunpack.c.h.b16 %v99
    %v232 = vunpack.c.l.b16 %v100
    %v233 = vunpack.c.h.b16 %v100
    %v234 = vunpack.c.l.b16 %v101
    %v235 = vunpack.c.h.b16 %v101
    %v236 = vunpack.c.l.b16 %v102
    %v237 = vunpack.c.h.b16 %v102
    %v238 = vunpack.c.l.b16 %v103
    %v239 = vunpack.c.h.b16 %v103
    %v240 = vunpack.c.l.b16 %v104
    %v241 = vunpack.c.h.b16 %v104
    %v242 = vunpack.c.l.b16 %v105
    %v243 = vunpack.c.h.b16 %v105
    %v244 = vunpack.c.l.b16 %v106
    %v245 = vunpack.c.h.b16 %v106
    %v246 = vunpack.c.l.b16 %v107
    %v247 = vunpack.c.h.b16 %v107
    %v248 = vunpack.c.l.b16 %v108
    %v249 = vunpack.c.h.b16 %v108
    %v250 = vunpack.c.l.b16 %v109
    %v251 = vunpack.c.h.b16 %v109
    %v252 = vunpack.c.l.b16 %v110
    %v253 = vunpack.c.h.b16 %v110
    %v254 = vunpack.c.l.b16 %v111
    %v255 = vunpack.c.h.b16 %v111
    %v256 = vunpack.c.l.b16 %v112
    %v257 = vunpack.c.h.b16 %v112
    %v258 = vunpack.c.l.b16 %v113
    %v259 = vunpack.c.h.b16 %v113
    %v260 = vunpack.c.l.b16 %v114
    %v261 = vunpack.c.h.b16 %v114
    %v262 = vunpack.c.l.b16 %v115
    %v263 = vunpack.c.h.b16 %v115
    %v264 = vunpack.c.l.b16 %v116
    %v265 = vunpack.c.h.b16 %v116
    %v266 = vunpack.c.l.b16 %v117
    %v267 = vunpack.c.h.b16 %v117
    %v268 = vunpack.c.l.b16 %v118
    %v269 = vunpack.c.h.b16 %v118
    %v270 = vunpack.c.l.b16 %v119
    %v271 = vunpack.c.h.b16 %v119
    %v272 = vunpack.c.l.b16 %v120
    %v273 = vunpack.c.h.b16 %v120
    %v274 = vunpack.c.l.b16 %v121
    %v275 = vunpack.c.h.b16 %v121
    %v276 = vunpack.c.l.b16 %v122
    %v277 = vunpack.c.h.b16 %v122
    %v278 = vunpack.c.l.b16 %v123
    %v279 = vunpack.c.h.b16 %v123
    %v280 = vunpack.c.l.b16 %v124
    %v281 = vunpack.c.h.b16 %v124
    %v282 = vunpack.c.l.b16 %v125
    %v283 = vunpack.c.h.b16 %v125
    %v284 = vunpack.c.l.b16 %v126
    %v285 = vunpack.c.h.b16 %v126
    %v286 = vunpack.c.l.b16 %v127
    %v287 = vunpack.c.h.b16 %v127
    %v288 = vunpack.c.l.b16 %v128
    %v289 = vunpack.c.h.b16 %v128
    %v290 = vunpack.c.l.b16 %v129
    %v291 = vunpack.c.h.b16 %v129
    %v292 = vunpack.c.l.b16 %v130
    %v293 = vunpack.c.h.b16 %v130
    %v294 = vunpack.c.l.b16 %v131
    %v295 = vunpack.c.h.b16 %v131
    %v296 = vunpack.c.l.b16 %v132
    %v297 = vunpack.c.h.b16 %v132
    %v298 = vunpack.c.l.b16 %v133
    %v299 = vunpack.c.h.b16 %v133
    %v300 = vunpack.c.l.b16 %v134
    %v301 = vunpack.c.h.b16 %v134
    %v302 = vunpack.c.l.b16 %v135
    %v303 = vunpack.c.h.b16 %v135
    %v304 = vunpack.c.l.b16 %v136
    %v305 = vunpack.c.h.b16 %v136
    %v306 = vunpack.c.l.b16 %v137
    %v307 = vunpack.c.h.b16 %v137
    %v308 = vunpack.c.l.b16 %v138
    %v309 = vunpack.c.h.b16 %v138
    %v310 = vunpack.c.l.b16 %v139
    %v311 = vunpack.c.h.b16 %v139
    %v312 = vunpack.c.l.b16 %v140
    %v313 = vunpack.c.h.b16 %v140
    %v314 = vunpack.c.l.b16 %v141
    %v315 = vunpack.c.h.b16 %v141
    %v316 = vunpack.c.l.b16 %v142
    %v317 = vunpack.c.h.b16 %v142
    %v318 = vunpack.c.l.b16 %v143
    %v319 = vunpack.c.h.b16 %v143
    %v320 = vunpack.c.l.b16 %v144
    %v321 = vunpack.c.h.b16 %v144
    %v322 = vunpack.c.l.b16 %v145
    %v323 = vunpack.c.h.b16 %v145
    %v324 = vunpack.c.l.b16 %v146
    %v325 = vunpack.c.h.b16 %v146
    %v326 = vunpack.c.l.b16 %v147
    %v327 = vunpack.c.h.b16 %v147
    %v328 = vunpack.c.l.b16 %v148
    %v329 = vunpack.c.h.b16 %v148
    %v330 = vunpack.c.l.b16 %v149
    %v331 = vunpack.c.h.b16 %v149
    %v332 = vunpack.c.l.b16 %v150
    %v333 = vunpack.c.h.b16 %v150
    %v334 = vunpack.c.l.b16 %v151
    %v335 = vunpack.c.h.b16 %v151
    %v336 = vunpack.c.l.b16 %v152
    %v337 = vunpack.c.h.b16 %v152
    %v338 = vunpack.c.l.b16 %v153
    %v339 = vunpack.c.h.b16 %v153
    %v340 = vunpack.c.l.b16 %v154
    %v341 = vunpack.c.h.b16 %v154
    %v342 = vunpack.c.l.b16 %v155
    %v343 = vunpack.c.h.b16 %v155
    %v344 = vunpack.c.l.b16 %v156
    %v345 = vunpack.c.h.b16 %v156
    %v346 = vunpack.c.l.b16 %v157
    %v347 = vunpack.c.h.b16 %v157
    %v348 = vunpack.c.l.b16 %v158
    %v349 = vunpack.c.h.b16 %v158
    %v350 = vunpack.c.l.b16 %v159
    %v351 = vunpack.c.h.b16 %v159
    %v352 = vpack.c.b16 %v228, %v224
    %v353 = vpack.c.b16 %v229, %v225
    %v354 = vpack.c.b16 %v230, %v226
    %v355 = vpack.c.b16 %v231, %v227
    %v356 = vpack.c.b16 %v236, %v232
    %v357 = vpack.c.b16 %v237, %v233
    %v358 = vpack.c.b16 %v238, %v234
    %v359 = vpack.c.b16 %v239, %v235
    %v360 = vpack.c.b16 %v244, %v240
    %v361 = vpack.c.b16 %v245, %v241
    %v362 = vpack.c.b16 %v246, %v242
    %v363 = vpack.c.b16 %v247, %v243
    %v364 = vpack.c.b16 %v252, %v248
    %v365 = vpack.c.b16 %v253, %v249
    %v366 = vpack.c.b16 %v254, %v250
    %v367 = vpack.c.b16 %v255, %v251
    %v368 = vpack.c.b16 %v260, %v256
    %v369 = vpack.c.b16 %v261, %v257
    %v370 = vpack.c.b16 %v262, %v258
    %v371 = vpack.c.b16 %v263, %v259
    %v372 = vpack.c.b16 %v268, %v264
    %v373 = vpack.c.b16 %v269, %v265
    %v374 = vpack.c.b16 %v270, %v266
    %v375 = vpack.c.b16 %v271, %v267
    %v376 = vpack.c.b16 %v276, %v272
    %v377 = vpack.c.b16 %v277, %v273
    %v378 = vpack.c.b16 %v278, %v274
    %v379 = vpack.c.b16 %v279, %v275
    %v380 = vpack.c.b16 %v284, %v280
    %v381 = vpack.c.b16 %v285, %v281
    %v382 = vpack.c.b16 %v286, %v282
    %v383 = vpack.c.b16 %v287, %v283
    %v384 = vpack.c.b16 %v292, %v288
    %v385 = vpack.c.b16 %v293, %v289
    %v386 = vpack.c.b16 %v294, %v290
    %v387 = vpack.c.b16 %v295, %v291
    %v388 = vpack.c.b16 %v300, %v296
    %v389 = vpack.c.b16 %v301, %v297
    %v390 = vpack.c.b16 %v302, %v298
    %v391 = vpack.c.b16 %v303, %v299
    %v392 = vpack.c.b16 %v308, %v304
    %v393 = vpack.c.b16 %v309, %v305
    %v394 = vpack.c.b16 %v310, %v306
    %v395 = vpack.c.b16 %v311, %v307
    %v396 = vpack.c.b16 %v316, %v312
    %v397 = vpack.c.b16 %v317, %v313
    %v398 = vpack.c.b16 %v318, %v314
    %v399 = vpack.c.b16 %v319, %v315
    %v400 = vpack.c.b16 %v324, %v320
    %v401 = vpack.c.b16 %v325, %v321
    %v402 = vpack.c.b16 %v326, %v322
    %v403 = vpack.c.b16 %v327, %v323
    %v404 = vpack.c.b16 %v332, %v328
    %v405 = vpack.c.b16 %v333, %v329
    %v406 = vpack.c.b16 %v334, %v330
    %v407 = vpack.c.b16 %v335, %v331
    %v408 = vpack.c.b16 %v340, %v336
    %v409 = vpack.c.b16 %v341, %v337
    %v410 = vpack.c.b16 %v342, %v338
    %v411 = vpack.c.b16 %v343, %v339
    %v412 = vpack.c.b16 %v348, %v344
    %v413 = vpack.c.b16 %v349, %v345
    %v414 = vpack.c.b16 %v350, %v346
    %v415 = vpack.c.b16 %v351, %v347
    %480 = vmatprep.subr.bf16.mxu0 %v353
    %481 = vmatpush1.bf16.msra.mxu0 %v352
    %482 = vmatprep.subr.bf16.mxu0 %v357
    %483 = vmatpush1.bf16.msra.mxu0 %v356
    %484 = vmatprep.subr.bf16.mxu0 %v361
    %485 = vmatpush1.bf16.msra.mxu0 %v360
    %486 = vmatprep.subr.bf16.mxu0 %v365
    %487 = vmatpush1.bf16.msra.mxu0 %v364
    %488 = vmatprep.subr.bf16.mxu0 %v369
    %489 = vmatpush1.bf16.msra.mxu0 %v368
    %490 = vmatprep.subr.bf16.mxu0 %v373
    %491 = vmatpush1.bf16.msra.mxu0 %v372
    %492 = vmatprep.subr.bf16.mxu0 %v377
    %493 = vmatpush1.bf16.msra.mxu0 %v376
    %494 = vmatprep.subr.bf16.mxu0 %v381
    %495 = vmatpush1.bf16.msra.mxu0 %v380
    %496 = vmatprep.subr.bf16.mxu0 %v385
    %497 = vmatpush1.bf16.msra.mxu0 %v384
    %498 = vmatprep.subr.bf16.mxu0 %v389
    %499 = vmatpush1.bf16.msra.mxu0 %v388
    %500 = vmatprep.subr.bf16.mxu0 %v393
    %501 = vmatpush1.bf16.msra.mxu0 %v392
    %502 = vmatprep.subr.bf16.mxu0 %v397
    %503 = vmatpush1.bf16.msra.mxu0 %v396
    %504 = vmatprep.subr.bf16.mxu0 %v401
    %505 = vmatpush1.bf16.msra.mxu0 %v400
    %506 = vmatprep.subr.bf16.mxu0 %v405
    %507 = vmatpush1.bf16.msra.mxu0 %v404
    %508 = vmatprep.subr.bf16.mxu0 %v409
    %509 = vmatpush1.bf16.msra.mxu0 %v408
    %510 = vmatprep.subr.bf16.mxu0 %v413
    %511 = vmatpush1.bf16.msra.mxu0 %v412
    %512 = vmatprep.mubr.bf16.mxu0 %v95
    %513 = vmatmul.mubr.bf16.gmra.mrb[0].mxu0 %v94
    %v514 = vpop.f32.mrb[0].mxu0
    %v515 = vadd.f32 0.0, %v514
    %v516 = vpop.f32.mrb[0].mxu0
    %v517 = vadd.f32 0.0, %v516
    %v518 = vpop.f32.mrb[0].mxu0
    %v519 = vadd.f32 0.0, %v518
    %v520 = vpop.f32.mrb[0].mxu0
    %v521 = vadd.f32 0.0, %v520
    %522 = vdwg.mxu0
    %523 = vmatprep.subr.bf16.mxu0 %v355
    %524 = vmatpush1.bf16.msra.mxu0 %v354
    %525 = vmatprep.subr.bf16.mxu0 %v359
    %526 = vmatpush1.bf16.msra.mxu0 %v358
    %527 = vmatprep.subr.bf16.mxu0 %v363
    %528 = vmatpush1.bf16.msra.mxu0 %v362
    %529 = vmatprep.subr.bf16.mxu0 %v367
    %530 = vmatpush1.bf16.msra.mxu0 %v366
    %531 = vmatprep.subr.bf16.mxu0 %v371
    %532 = vmatpush1.bf16.msra.mxu0 %v370
    %533 = vmatprep.subr.bf16.mxu0 %v375
    %534 = vmatpush1.bf16.msra.mxu0 %v374
    %535 = vmatprep.subr.bf16.mxu0 %v379
    %536 = vmatpush1.bf16.msra.mxu0 %v378
    %537 = vmatprep.subr.bf16.mxu0 %v383
    %538 = vmatpush1.bf16.msra.mxu0 %v382
    %539 = vmatprep.subr.bf16.mxu0 %v387
    %540 = vmatpush1.bf16.msra.mxu0 %v386
    %541 = vmatprep.subr.bf16.mxu0 %v391
    %542 = vmatpush1.bf16.msra.mxu0 %v390
    %543 = vmatprep.subr.bf16.mxu0 %v395
    %544 = vmatpush1.bf16.msra.mxu0 %v394
    %545 = vmatprep.subr.bf16.mxu0 %v399
    %546 = vmatpush1.bf16.msra.mxu0 %v398
    %547 = vmatprep.subr.bf16.mxu0 %v403
    %548 = vmatpush1.bf16.msra.mxu0 %v402
    %549 = vmatprep.subr.bf16.mxu0 %v407
    %550 = vmatpush1.bf16.msra.mxu0 %v406
    %551 = vmatprep.subr.bf16.mxu0 %v411
    %552 = vmatpush1.bf16.msra.mxu0 %v410
    %553 = vmatprep.subr.bf16.mxu0 %v415
    %554 = vmatpush1.bf16.msra.mxu0 %v414
    %555 = vmatprep.mubr.bf16.mxu0 %v95
    %556 = vmatmul.mubr.bf16.gmra.mrb[0].mxu0 %v94
    %v557 = vpop.f32.mrb[0].mxu0
    %v558 = vadd.f32 0.0, %v557
    %v559 = vpop.f32.mrb[0].mxu0
    %v560 = vadd.f32 0.0, %v559
    %v561 = vpop.f32.mrb[0].mxu0
    %v562 = vadd.f32 0.0, %v561
    %v563 = vpop.f32.mrb[0].mxu0
    %v564 = vadd.f32 0.0, %v563
    %565 = vdwg.mxu0
    %v566 = vld [vmem:[#allocation8] sm:$0xff]
    %v567 = vld [vmem:[#allocation8 + $0x8] sm:$0xff]
    %v568 = vmul.f32 %v515, 0.5
    %v569 = vmul.f32 %v517, 0.5
    %v570 = vmul.f32 %v519, 0.5
    %v571 = vmul.f32 %v521, 0.5
    %v572 = vtanh.pop %v568
    %v573 = vtanh.pop %v569
    %v574 = vtanh.pop %v570
    %v575 = vtanh.pop %v571
    %v576 = vmul.f32 %v572, 0.5
    %v577 = vmul.f32 %v573, 0.5
    %v578 = vmul.f32 %v574, 0.5
    %v579 = vmul.f32 %v575, 0.5
    %v580 = vadd.f32 %v576, 0.5
    %v581 = vadd.f32 %v577, 0.5
    %v582 = vadd.f32 %v578, 0.5
    %v583 = vadd.f32 %v579, 0.5
    %v584 = vtanh.pop %v558
    %v585 = vtanh.pop %v562
    %v586 = vmul.f32 %v560, 0.5
    %v587 = vmul.f32 %v564, 0.5
    %v588 = vtanh.pop %v586
    %v589 = vtanh.pop %v587
    %v590 = vmul.f32 %v588, 0.5
    %v591 = vmul.f32 %v589, 0.5
    %v592 = vadd.f32 %v590, 0.5
    %v593 = vadd.f32 %v591, 0.5
    %v594 = vmul.f32 %v581, %v566
    %v595 = vmul.f32 %v583, %v567
    %v596 = vmul.f32 %v580, %v584
    %v597 = vmul.f32 %v582, %v585
    %v598 = vadd.f32 %v594, %v596
    %v599 = vadd.f32 %v595, %v597
    %v600 = vtanh.pop %v598
    %v601 = vtanh.pop %v599
    %v602 = vmul.f32 %v592, %v600
    %v603 = vmul.f32 %v593, %v601
    %v604 = vpack.c.bf16 %v603, %v602
    %v606 = vunpack.c.l.b16 %v604
    %v607 = vunpack.c.h.b16 %v604
    %v608 = vpack.c.b16 %v606, %v606
    %v609 = vpack.c.b16 %v607, %v607
    %612 = vst [vmem:[#allocation11] sm:$0xf] %v608
    %613 = vst [vmem:[#allocation11 + $0x4] sm:$0xf] %v609
    %614 = vst [vmem:[#allocation12] sm:$0xff] %v598
    %615 = vst [vmem:[#allocation12 + $0x8] sm:$0xff] %v599
    // Predicated region
    $region34: #{tpu_custom_call.1} parent=1 // pred_check
      _
    $region35: #{tpu_custom_call.1} parent=1 // pred_check_branch
      %617 = sbr.rel (0) target = $region37
    $region36: #{tpu_custom_call.1} parent=1 // pred_region
      %s619 = ssub.s32 128, 128
      %620 = vsyncadd [#allocation5], %s619
      %s621 = sshll.u32 [#allocation11], 4
      %s622 = int_to_ptr.vmem [resolvable:$true] %s621
      %627 = dma.vmem_to_hbm [thread:$0]  %s622, 128, %s4, [#allocation5], 64, 64, 4
    $region37: #{tpu_custom_call.1} parent=1 // pred_fallthru
      _
    // Predicated region
    $region38: #{tpu_custom_call.1} parent=1 // pred_check
      _
    $region39: #{tpu_custom_call.1} parent=1 // pred_check_branch
      %629 = sbr.rel (0) target = $region41
    $region40: #{tpu_custom_call.1} parent=1 // pred_region
      %s631 = ssub.s32 256, 256
      %632 = vsyncadd [#allocation13], %s631
      %s633 = sshll.u32 [#allocation12], 4
      %s634 = int_to_ptr.vmem [resolvable:$true] %s633
      %639 = dma.vmem_to_hbm [thread:$0]  %s634, 256, %s5, [#allocation13], 128, 128, 8
    $region41: #{tpu_custom_call.1} parent=1 // pred_fallthru
      _
    // Predicated region
    $region42: #{tpu_custom_call.1} parent=1 // pred_check
      _
    $region43: #{tpu_custom_call.1} parent=1 // pred_check_branch
      %641 = sbr.rel (0) target = $region45
    $region44: #{tpu_custom_call.1} parent=1 // pred_region
      %642 = dma.done [#allocation5], 128
    $region45: #{tpu_custom_call.1} parent=1 // pred_fallthru
      _
    // Predicated region
    $region46: #{tpu_custom_call.1} parent=1 // pred_check
      _
    $region47: #{tpu_custom_call.1} parent=1 // pred_check_branch
      %644 = sbr.rel (0) target = $region49
    $region48: #{tpu_custom_call.1} parent=1 // pred_region
      %645 = dma.done [#allocation13], 256
    $region49: #{tpu_custom_call.1} parent=1 // pred_fallthru
      _
    %646 = vsyncpa [#allocation4], 1
    %647 = vsyncpa [#allocation7], 1
    %648 = vsyncpa [#allocation10], 1
    %649 = vsyncpa [#allocation5], 1
    %650 = vsyncpa [#allocation13], 1

// kernel: tpu_custom_call.1
$region0: #{tpu_custom_call.1}
  #allocation0 [shape = 'u32[]', space=smem, size = 0x4, offset = 0x4, fixed_abs, tag = 'smem constant byte address 0x4 - core index']
  #allocation1 [shape = 'u32[144,128]{1,0:T(1,128)}', space=vmem, size = 0x12000, scoped, tag = 'internal scratch']
  #allocation2 [shape = 'bf16[16,256]{1,0:T(16,128)(2,1)}', space=vmem, size = 0x2000, scoped, tag = 'scratch operand']
  %s0 = inlined_call_operand.hbm [shape: bf16[16,128], index: 0, kind: input, shape index: {}]
  %s1 = inlined_call_operand.hbm [shape: bf16[16,128], index: 1, kind: input, shape index: {}]
  %s2 = inlined_call_operand.hbm [shape: f32[16,128], index: 2, kind: input, shape index: {}]
  %s3 = inlined_call_operand.hbm [shape: bf16[256,512], index: 3, kind: input, shape index: {}]
  %s4 = inlined_call_operand.hbm [shape: bf16[16,128], index: 4, kind: output, shape index: {0}]
  %s5 = inlined_call_operand.hbm [shape: f32[16,128], index: 5, kind: output, shape index: {1}]
  %6 = xla_tuple %s4, %s5
  %s7 = sld [smem:[#allocation0]]
  $region50: #{tpu_custom_call.1} parent=0
    _
  %s9 = ssub.s32 1, %s7
  %s10 = scalar_select 0, %s9, %s7
  $region1: #{tpu_custom_call.1} parent=0
    #allocation3 [shape = 'u8[4096]{0}', space=vmem, size = 0x1000, scoped, tag = 'input window, operand 0, single buffered']
    #allocation4 [shape = 's32[1]{0}', space=sflag, size = 0x4, scoped, tag = 'scoped memory for tpu_custom_call.1']
    #allocation5 [shape = 's32[1]{0}', space=sflag, size = 0x4, scoped, tag = 'scoped memory for tpu_custom_call.1']
    #allocation6 [shape = 'u8[4096]{0}', space=vmem, size = 0x1000, scoped, tag = 'input window, operand 1, single buffered']
    #allocation7 [shape = 's32[1]{0}', space=sflag, size = 0x4, scoped, tag = 'scoped memory for tpu_custom_call.1']
    #allocation8 [shape = 'u8[8192]{0}', space=vmem, size = 0x2000, scoped, tag = 'input window, operand 2, single buffered']
    #allocation9 [shape = 'u8[262144]{0}', space=vmem, size = 0x40000, scoped, tag = 'input window, operand 3, single buffered']
    #allocation10 [shape = 's32[1]{0}', space=sflag, size = 0x4, scoped, tag = 'scoped memory for tpu_custom_call.1']
    #allocation11 [shape = 'u8[4096]{0}', space=vmem, size = 0x1000, scoped, tag = 'output window, operand 0, single buffered']
    #allocation12 [shape = 'u8[8192]{0}', space=vmem, size = 0x2000, scoped, tag = 'output window, operand 1, single buffered']
    #allocation13 [shape = 's32[1]{0}', space=sflag, size = 0x4, scoped, tag = 'scoped memory for tpu_custom_call.1']
    %11 = vsyncpa [#allocation4], 0
    %12 = vsyncpa [#allocation7], 0
    %13 = vsyncpa [#allocation10], 0
    %14 = vsyncpa [#allocation5], 0
    %15 = vsyncpa [#allocation13], 0
    // Predicated region
    $region2: #{tpu_custom_call.1} parent=1 // pred_check
      _
    $region3: #{tpu_custom_call.1} parent=1 // pred_check_branch
      %17 = sbr.rel (0) target = $region5
    $region4: #{tpu_custom_call.1} parent=1 // pred_region
      %s19 = ssub.s32 128, 128
      %20 = vsyncadd [#allocation4], %s19
      %s21 = sshll.u32 [#allocation3], 4
      %s22 = int_to_ptr.vmem [resolvable:$true] %s21
      %27 = dma.hbm_to_vmem [thread:$0]  %s0, 128, %s22, [#allocation4], 64, 64, 4
    $region5: #{tpu_custom_call.1} parent=1 // pred_fallthru
      _
    // Predicated region
    $region6: #{tpu_custom_call.1} parent=1 // pred_check
      _
    $region7: #{tpu_custom_call.1} parent=1 // pred_check_branch
      %29 = sbr.rel (0) target = $region9
    $region8: #{tpu_custom_call.1} parent=1 // pred_region
      %s31 = ssub.s32 128, 128
      %32 = vsyncadd [#allocation7], %s31
      %s33 = sshll.u32 [#allocation6], 4
      %s34 = int_to_ptr.vmem [resolvable:$true] %s33
      %39 = dma.hbm_to_vmem [thread:$0]  %s1, 128, %s34, [#allocation7], 64, 64, 4
    $region9: #{tpu_custom_call.1} parent=1 // pred_fallthru
      _
    // Predicated region
    $region10: #{tpu_custom_call.1} parent=1 // pred_check
      _
    $region11: #{tpu_custom_call.1} parent=1 // pred_check_branch
      %41 = sbr.rel (0) target = $region13
    $region12: #{tpu_custom_call.1} parent=1 // pred_region
      %s43 = ssub.s32 256, 256
      %44 = vsyncadd [#allocation7], %s43
      %s45 = sshll.u32 [#allocation8], 4
      %s46 = int_to_ptr.vmem [resolvable:$true] %s45
      %51 = dma.hbm_to_vmem [thread:$0]  %s2, 256, %s46, [#allocation7], 128, 128, 8
    $region13: #{tpu_custom_call.1} parent=1 // pred_fallthru
      _
    // Predicated region
    $region14: #{tpu_custom_call.1} parent=1 // pred_check
      _
    $region15: #{tpu_custom_call.1} parent=1 // pred_check_branch
      %53 = sbr.rel (0) target = $region17
    $region16: #{tpu_custom_call.1} parent=1 // pred_region
      %s55 = ssub.s32 8192, 8192
      %56 = vsyncadd [#allocation10], %s55
      %s57 = sshll.u32 [#allocation9], 4
      %s58 = int_to_ptr.vmem [resolvable:$true] %s57
      %63 = dma.hbm_to_vmem [thread:$0]  %s3, 8192, %s58, [#allocation10], 256, 256, 16
    $region17: #{tpu_custom_call.1} parent=1 // pred_fallthru
      _
    // Predicated region
    $region18: #{tpu_custom_call.1} parent=1 // pred_check
      _
    $region19: #{tpu_custom_call.1} parent=1 // pred_check_branch
      %65 = sbr.rel (0) target = $region21
    $region20: #{tpu_custom_call.1} parent=1 // pred_region
      %66 = dma.done [#allocation4], 128
    $region21: #{tpu_custom_call.1} parent=1 // pred_fallthru
      _
    // Predicated region
    $region22: #{tpu_custom_call.1} parent=1 // pred_check
      _
    $region23: #{tpu_custom_call.1} parent=1 // pred_check_branch
      %68 = sbr.rel (0) target = $region25
    $region24: #{tpu_custom_call.1} parent=1 // pred_region
      %69 = dma.done [#allocation7], 128
    $region25: #{tpu_custom_call.1} parent=1 // pred_fallthru
      _
    // Predicated region
    $region26: #{tpu_custom_call.1} parent=1 // pred_check
      _
    $region27: #{tpu_custom_call.1} parent=1 // pred_check_branch
      %71 = sbr.rel (0) target = $region29
    $region28: #{tpu_custom_call.1} parent=1 // pred_region
      %72 = dma.done [#allocation7], 256
    $region29: #{tpu_custom_call.1} parent=1 // pred_fallthru
      _
    // Predicated region
    $region30: #{tpu_custom_call.1} parent=1 // pred_check
      _
    $region31: #{tpu_custom_call.1} parent=1 // pred_check_branch
      %74 = sbr.rel (0) target = $region33
    $region32: #{tpu_custom_call.1} parent=1 // pred_region
      %75 = dma.done [#allocation10], 8192
    $region33: #{tpu_custom_call.1} parent=1 // pred_fallthru
      _
    %v76 = vld [vmem:[#allocation3] sm:$0xf]
    %v77 = vld [vmem:[#allocation3 + $0x4] sm:$0xf]
    %v80 = vunpack.c.l.b16 %v76
    %v81 = vunpack.c.l.b16 %v77
    %v82 = vpack.c.b16 %v81, %v80
    %84 = vst [vmem:[#allocation2] sm:$0xff] %v82
    %v85 = vld [vmem:[#allocation6] sm:$0xf]
    %v86 = vld [vmem:[#allocation6 + $0x4] sm:$0xf]
    %v89 = vunpack.c.l.b16 %v85
    %v90 = vunpack.c.l.b16 %v86
    %v91 = vpack.c.b16 %v90, %v89
    %93 = vst [vmem:[#allocation2 + $0x8] sm:$0xff] %v91
    %v94 = vld [vmem:[#allocation2] sm:$0xff]
    %v95 = vld [vmem:[#allocation2 + $0x8] sm:$0xff]
    %v96 = vld [vmem:[#allocation9] sm:$0xff]
    %v97 = vld [vmem:[#allocation9 + $0x8] sm:$0xff]
    %v98 = vld [vmem:[#allocation9 + $0x10] sm:$0xff]
    %v99 = vld [vmem:[#allocation9 + $0x18] sm:$0xff]
    %v100 = vld [vmem:[#allocation9 + $0x20] sm:$0xff]
    %v101 = vld [vmem:[#allocation9 + $0x28] sm:$0xff]
    %v102 = vld [vmem:[#allocation9 + $0x30] sm:$0xff]
    %v103 = vld [vmem:[#allocation9 + $0x38] sm:$0xff]
    %v104 = vld [vmem:[#allocation9 + $0x40] sm:$0xff]
    %v105 = vld [vmem:[#allocation9 + $0x48] sm:$0xff]
    %v106 = vld [vmem:[#allocation9 + $0x50] sm:$0xff]
    %v107 = vld [vmem:[#allocation9 + $0x58] sm:$0xff]
    %v108 = vld [vmem:[#allocation9 + $0x60] sm:$0xff]
    %v109 = vld [vmem:[#allocation9 + $0x68] sm:$0xff]
    %v110 = vld [vmem:[#allocation9 + $0x70] sm:$0xff]
    %v111 = vld [vmem:[#allocation9 + $0x78] sm:$0xff]
    %v112 = vld [vmem:[#allocation9 + $0x80] sm:$0xff]
    %v113 = vld [vmem:[#allocation9 + $0x88] sm:$0xff]
    %v114 = vld [vmem:[#allocation9 + $0x90] sm:$0xff]
    %v115 = vld [vmem:[#allocation9 + $0x98] sm:$0xff]
    %v116 = vld [vmem:[#allocation9 + $0xa0] sm:$0xff]
    %v117 = vld [vmem:[#allocation9 + $0xa8] sm:$0xff]
    %v118 = vld [vmem:[#allocation9 + $0xb0] sm:$0xff]
    %v119 = vld [vmem:[#allocation9 + $0xb8] sm:$0xff]
    %v120 = vld [vmem:[#allocation9 + $0xc0] sm:$0xff]
    %v121 = vld [vmem:[#allocation9 + $0xc8] sm:$0xff]
    %v122 = vld [vmem:[#allocation9 + $0xd0] sm:$0xff]
    %v123 = vld [vmem:[#allocation9 + $0xd8] sm:$0xff]
    %v124 = vld [vmem:[#allocation9 + $0xe0] sm:$0xff]
    %v125 = vld [vmem:[#allocation9 + $0xe8] sm:$0xff]
    %v126 = vld [vmem:[#allocation9 + $0xf0] sm:$0xff]
    %v127 = vld [vmem:[#allocation9 + $0xf8] sm:$0xff]
    %v128 = vld [vmem:[#allocation9 + $0x100] sm:$0xff]
    %v129 = vld [vmem:[#allocation9 + $0x108] sm:$0xff]
    %v130 = vld [vmem:[#allocation9 + $0x110] sm:$0xff]
    %v131 = vld [vmem:[#allocation9 + $0x118] sm:$0xff]
    %v132 = vld [vmem:[#allocation9 + $0x120] sm:$0xff]
    %v133 = vld [vmem:[#allocation9 + $0x128] sm:$0xff]
    %v134 = vld [vmem:[#allocation9 + $0x130] sm:$0xff]
    %v135 = vld [vmem:[#allocation9 + $0x138] sm:$0xff]
    %v136 = vld [vmem:[#allocation9 + $0x140] sm:$0xff]
    %v137 = vld [vmem:[#allocation9 + $0x148] sm:$0xff]
    %v138 = vld [vmem:[#allocation9 + $0x150] sm:$0xff]
    %v139 = vld [vmem:[#allocation9 + $0x158] sm:$0xff]
    %v140 = vld [vmem:[#allocation9 + $0x160] sm:$0xff]
    %v141 = vld [vmem:[#allocation9 + $0x168] sm:$0xff]
    %v142 = vld [vmem:[#allocation9 + $0x170] sm:$0xff]
    %v143 = vld [vmem:[#allocation9 + $0x178] sm:$0xff]
    %v144 = vld [vmem:[#allocation9 + $0x180] sm:$0xff]
    %v145 = vld [vmem:[#allocation9 + $0x188] sm:$0xff]
    %v146 = vld [vmem:[#allocation9 + $0x190] sm:$0xff]
    %v147 = vld [vmem:[#allocation9 + $0x198] sm:$0xff]
    %v148 = vld [vmem:[#allocation9 + $0x1a0] sm:$0xff]
    %v149 = vld [vmem:[#allocation9 + $0x1a8] sm:$0xff]
    %v150 = vld [vmem:[#allocation9 + $0x1b0] sm:$0xff]
    %v151 = vld [vmem:[#allocation9 + $0x1b8] sm:$0xff]
    %v152 = vld [vmem:[#allocation9 + $0x1c0] sm:$0xff]
    %v153 = vld [vmem:[#allocation9 + $0x1c8] sm:$0xff]
    %v154 = vld [vmem:[#allocation9 + $0x1d0] sm:$0xff]
    %v155 = vld [vmem:[#allocation9 + $0x1d8] sm:$0xff]
    %v156 = vld [vmem:[#allocation9 + $0x1e0] sm:$0xff]
    %v157 = vld [vmem:[#allocation9 + $0x1e8] sm:$0xff]
    %v158 = vld [vmem:[#allocation9 + $0x1f0] sm:$0xff]
    %v159 = vld [vmem:[#allocation9 + $0x1f8] sm:$0xff]
    %v224 = vunpack.c.l.b16 %v96
    %v225 = vunpack.c.h.b16 %v96
    %v226 = vunpack.c.l.b16 %v97
    %v227 = vunpack.c.h.b16 %v97
    %v228 = vunpack.c.l.b16 %v98
    %v229 = vunpack.c.h.b16 %v98
    %v230 = vunpack.c.l.b16 %v99
    %v231 = vunpack.c.h.b16 %v99
    %v232 = vunpack.c.l.b16 %v100
    %v233 = vunpack.c.h.b16 %v100
    %v234 = vunpack.c.l.b16 %v101
    %v235 = vunpack.c.h.b16 %v101
    %v236 = vunpack.c.l.b16 %v102
    %v237 = vunpack.c.h.b16 %v102
    %v238 = vunpack.c.l.b16 %v103
    %v239 = vunpack.c.h.b16 %v103
    %v240 = vunpack.c.l.b16 %v104
    %v241 = vunpack.c.h.b16 %v104
    %v242 = vunpack.c.l.b16 %v105
    %v243 = vunpack.c.h.b16 %v105
    %v244 = vunpack.c.l.b16 %v106
    %v245 = vunpack.c.h.b16 %v106
    %v246 = vunpack.c.l.b16 %v107
    %v247 = vunpack.c.h.b16 %v107
    %v248 = vunpack.c.l.b16 %v108
    %v249 = vunpack.c.h.b16 %v108
    %v250 = vunpack.c.l.b16 %v109
    %v251 = vunpack.c.h.b16 %v109
    %v252 = vunpack.c.l.b16 %v110
    %v253 = vunpack.c.h.b16 %v110
    %v254 = vunpack.c.l.b16 %v111
    %v255 = vunpack.c.h.b16 %v111
    %v256 = vunpack.c.l.b16 %v112
    %v257 = vunpack.c.h.b16 %v112
    %v258 = vunpack.c.l.b16 %v113
    %v259 = vunpack.c.h.b16 %v113
    %v260 = vunpack.c.l.b16 %v114
    %v261 = vunpack.c.h.b16 %v114
    %v262 = vunpack.c.l.b16 %v115
    %v263 = vunpack.c.h.b16 %v115
    %v264 = vunpack.c.l.b16 %v116
    %v265 = vunpack.c.h.b16 %v116
    %v266 = vunpack.c.l.b16 %v117
    %v267 = vunpack.c.h.b16 %v117
    %v268 = vunpack.c.l.b16 %v118
    %v269 = vunpack.c.h.b16 %v118
    %v270 = vunpack.c.l.b16 %v119
    %v271 = vunpack.c.h.b16 %v119
    %v272 = vunpack.c.l.b16 %v120
    %v273 = vunpack.c.h.b16 %v120
    %v274 = vunpack.c.l.b16 %v121
    %v275 = vunpack.c.h.b16 %v121
    %v276 = vunpack.c.l.b16 %v122
    %v277 = vunpack.c.h.b16 %v122
    %v278 = vunpack.c.l.b16 %v123
    %v279 = vunpack.c.h.b16 %v123
    %v280 = vunpack.c.l.b16 %v124
    %v281 = vunpack.c.h.b16 %v124
    %v282 = vunpack.c.l.b16 %v125
    %v283 = vunpack.c.h.b16 %v125
    %v284 = vunpack.c.l.b16 %v126
    %v285 = vunpack.c.h.b16 %v126
    %v286 = vunpack.c.l.b16 %v127
    %v287 = vunpack.c.h.b16 %v127
    %v288 = vunpack.c.l.b16 %v128
    %v289 = vunpack.c.h.b16 %v128
    %v290 = vunpack.c.l.b16 %v129
    %v291 = vunpack.c.h.b16 %v129
    %v292 = vunpack.c.l.b16 %v130
    %v293 = vunpack.c.h.b16 %v130
    %v294 = vunpack.c.l.b16 %v131
    %v295 = vunpack.c.h.b16 %v131
    %v296 = vunpack.c.l.b16 %v132
    %v297 = vunpack.c.h.b16 %v132
    %v298 = vunpack.c.l.b16 %v133
    %v299 = vunpack.c.h.b16 %v133
    %v300 = vunpack.c.l.b16 %v134
    %v301 = vunpack.c.h.b16 %v134
    %v302 = vunpack.c.l.b16 %v135
    %v303 = vunpack.c.h.b16 %v135
    %v304 = vunpack.c.l.b16 %v136
    %v305 = vunpack.c.h.b16 %v136
    %v306 = vunpack.c.l.b16 %v137
    %v307 = vunpack.c.h.b16 %v137
    %v308 = vunpack.c.l.b16 %v138
    %v309 = vunpack.c.h.b16 %v138
    %v310 = vunpack.c.l.b16 %v139
    %v311 = vunpack.c.h.b16 %v139
    %v312 = vunpack.c.l.b16 %v140
    %v313 = vunpack.c.h.b16 %v140
    %v314 = vunpack.c.l.b16 %v141
    %v315 = vunpack.c.h.b16 %v141
    %v316 = vunpack.c.l.b16 %v142
    %v317 = vunpack.c.h.b16 %v142
    %v318 = vunpack.c.l.b16 %v143
    %v319 = vunpack.c.h.b16 %v143
    %v320 = vunpack.c.l.b16 %v144
    %v321 = vunpack.c.h.b16 %v144
    %v322 = vunpack.c.l.b16 %v145
    %v323 = vunpack.c.h.b16 %v145
    %v324 = vunpack.c.l.b16 %v146
    %v325 = vunpack.c.h.b16 %v146
    %v326 = vunpack.c.l.b16 %v147
    %v327 = vunpack.c.h.b16 %v147
    %v328 = vunpack.c.l.b16 %v148
    %v329 = vunpack.c.h.b16 %v148
    %v330 = vunpack.c.l.b16 %v149
    %v331 = vunpack.c.h.b16 %v149
    %v332 = vunpack.c.l.b16 %v150
    %v333 = vunpack.c.h.b16 %v150
    %v334 = vunpack.c.l.b16 %v151
    %v335 = vunpack.c.h.b16 %v151
    %v336 = vunpack.c.l.b16 %v152
    %v337 = vunpack.c.h.b16 %v152
    %v338 = vunpack.c.l.b16 %v153
    %v339 = vunpack.c.h.b16 %v153
    %v340 = vunpack.c.l.b16 %v154
    %v341 = vunpack.c.h.b16 %v154
    %v342 = vunpack.c.l.b16 %v155
    %v343 = vunpack.c.h.b16 %v155
    %v344 = vunpack.c.l.b16 %v156
    %v345 = vunpack.c.h.b16 %v156
    %v346 = vunpack.c.l.b16 %v157
    %v347 = vunpack.c.h.b16 %v157
    %v348 = vunpack.c.l.b16 %v158
    %v349 = vunpack.c.h.b16 %v158
    %v350 = vunpack.c.l.b16 %v159
    %v351 = vunpack.c.h.b16 %v159
    %v352 = vpack.c.b16 %v228, %v224
    %v353 = vpack.c.b16 %v229, %v225
    %v354 = vpack.c.b16 %v230, %v226
    %v355 = vpack.c.b16 %v231, %v227
    %v356 = vpack.c.b16 %v236, %v232
    %v357 = vpack.c.b16 %v237, %v233
    %v358 = vpack.c.b16 %v238, %v234
    %v359 = vpack.c.b16 %v239, %v235
    %v360 = vpack.c.b16 %v244, %v240
    %v361 = vpack.c.b16 %v245, %v241
    %v362 = vpack.c.b16 %v246, %v242
    %v363 = vpack.c.b16 %v247, %v243
    %v364 = vpack.c.b16 %v252, %v248
    %v365 = vpack.c.b16 %v253, %v249
    %v366 = vpack.c.b16 %v254, %v250
    %v367 = vpack.c.b16 %v255, %v251
    %v368 = vpack.c.b16 %v260, %v256
    %v369 = vpack.c.b16 %v261, %v257
    %v370 = vpack.c.b16 %v262, %v258
    %v371 = vpack.c.b16 %v263, %v259
    %v372 = vpack.c.b16 %v268, %v264
    %v373 = vpack.c.b16 %v269, %v265
    %v374 = vpack.c.b16 %v270, %v266
    %v375 = vpack.c.b16 %v271, %v267
    %v376 = vpack.c.b16 %v276, %v272
    %v377 = vpack.c.b16 %v277, %v273
    %v378 = vpack.c.b16 %v278, %v274
    %v379 = vpack.c.b16 %v279, %v275
    %v380 = vpack.c.b16 %v284, %v280
    %v381 = vpack.c.b16 %v285, %v281
    %v382 = vpack.c.b16 %v286, %v282
    %v383 = vpack.c.b16 %v287, %v283
    %v384 = vpack.c.b16 %v292, %v288
    %v385 = vpack.c.b16 %v293, %v289
    %v386 = vpack.c.b16 %v294, %v290
    %v387 = vpack.c.b16 %v295, %v291
    %v388 = vpack.c.b16 %v300, %v296
    %v389 = vpack.c.b16 %v301, %v297
    %v390 = vpack.c.b16 %v302, %v298
    %v391 = vpack.c.b16 %v303, %v299
    %v392 = vpack.c.b16 %v308, %v304
    %v393 = vpack.c.b16 %v309, %v305
    %v394 = vpack.c.b16 %v310, %v306
    %v395 = vpack.c.b16 %v311, %v307
    %v396 = vpack.c.b16 %v316, %v312
    %v397 = vpack.c.b16 %v317, %v313
    %v398 = vpack.c.b16 %v318, %v314
    %v399 = vpack.c.b16 %v319, %v315
    %v400 = vpack.c.b16 %v324, %v320
    %v401 = vpack.c.b16 %v325, %v321
    %v402 = vpack.c.b16 %v326, %v322
    %v403 = vpack.c.b16 %v327, %v323
    %v404 = vpack.c.b16 %v332, %v328
    %v405 = vpack.c.b16 %v333, %v329
    %v406 = vpack.c.b16 %v334, %v330
    %v407 = vpack.c.b16 %v335, %v331
    %v408 = vpack.c.b16 %v340, %v336
    %v409 = vpack.c.b16 %v341, %v337
    %v410 = vpack.c.b16 %v342, %v338
    %v411 = vpack.c.b16 %v343, %v339
    %v412 = vpack.c.b16 %v348, %v344
    %v413 = vpack.c.b16 %v349, %v345
    %v414 = vpack.c.b16 %v350, %v346
    %v415 = vpack.c.b16 %v351, %v347
    %480 = vmatprep.subr.bf16.mxu0 %v353
    %481 = vmatpush1.bf16.msra.mxu0 %v352
    %482 = vmatprep.subr.bf16.mxu0 %v357
    %483 = vmatpush1.bf16.msra.mxu0 %v356
    %484 = vmatprep.subr.bf16.mxu0 %v361
    %485 = vmatpush1.bf16.msra.mxu0 %v360
    %486 = vmatprep.subr.bf16.mxu0 %v365
    %487 = vmatpush1.bf16.msra.mxu0 %v364
    %488 = vmatprep.subr.bf16.mxu0 %v369
    %489 = vmatpush1.bf16.msra.mxu0 %v368
    %490 = vmatprep.subr.bf16.mxu0 %v373
    %491 = vmatpush1.bf16.msra.mxu0 %v372
    %492 = vmatprep.subr.bf16.mxu0 %v377
    %493 = vmatpush1.bf16.msra.mxu0 %v376
    %494 = vmatprep.subr.bf16.mxu0 %v381
    %495 = vmatpush1.bf16.msra.mxu0 %v380
    %496 = vmatprep.subr.bf16.mxu0 %v385
    %497 = vmatpush1.bf16.msra.mxu0 %v384
    %498 = vmatprep.subr.bf16.mxu0 %v389
    %499 = vmatpush1.bf16.msra.mxu0 %v388
    %500 = vmatprep.subr.bf16.mxu0 %v393
    %501 = vmatpush1.bf16.msra.mxu0 %v392
    %502 = vmatprep.subr.bf16.mxu0 %v397
    %503 = vmatpush1.bf16.msra.mxu0 %v396
    %504 = vmatprep.subr.bf16.mxu0 %v401
    %505 = vmatpush1.bf16.msra.mxu0 %v400
    %506 = vmatprep.subr.bf16.mxu0 %v405
    %507 = vmatpush1.bf16.msra.mxu0 %v404
    %508 = vmatprep.subr.bf16.mxu0 %v409
    %509 = vmatpush1.bf16.msra.mxu0 %v408
    %510 = vmatprep.subr.bf16.mxu0 %v413
    %511 = vmatpush1.bf16.msra.mxu0 %v412
    %512 = vmatprep.mubr.bf16.mxu0 %v95
    %513 = vmatmul.mubr.bf16.gmra.mrb[0].mxu0 %v94
    %v514 = vpop.f32.mrb[0].mxu0
    %v515 = vadd.f32 0.0, %v514
    %v516 = vpop.f32.mrb[0].mxu0
    %v517 = vadd.f32 0.0, %v516
    %v518 = vpop.f32.mrb[0].mxu0
    %v519 = vadd.f32 0.0, %v518
    %v520 = vpop.f32.mrb[0].mxu0
    %v521 = vadd.f32 0.0, %v520
    %522 = vdwg.mxu0
    %523 = vmatprep.subr.bf16.mxu0 %v355
    %524 = vmatpush1.bf16.msra.mxu0 %v354
    %525 = vmatprep.subr.bf16.mxu0 %v359
    %526 = vmatpush1.bf16.msra.mxu0 %v358
    %527 = vmatprep.subr.bf16.mxu0 %v363
    %528 = vmatpush1.bf16.msra.mxu0 %v362
    %529 = vmatprep.subr.bf16.mxu0 %v367
    %530 = vmatpush1.bf16.msra.mxu0 %v366
    %531 = vmatprep.subr.bf16.mxu0 %v371
    %532 = vmatpush1.bf16.msra.mxu0 %v370
    %533 = vmatprep.subr.bf16.mxu0 %v375
    %534 = vmatpush1.bf16.msra.mxu0 %v374
    %535 = vmatprep.subr.bf16.mxu0 %v379
    %536 = vmatpush1.bf16.msra.mxu0 %v378
    %537 = vmatprep.subr.bf16.mxu0 %v383
    %538 = vmatpush1.bf16.msra.mxu0 %v382
    %539 = vmatprep.subr.bf16.mxu0 %v387
    %540 = vmatpush1.bf16.msra.mxu0 %v386
    %541 = vmatprep.subr.bf16.mxu0 %v391
    %542 = vmatpush1.bf16.msra.mxu0 %v390
    %543 = vmatprep.subr.bf16.mxu0 %v395
    %544 = vmatpush1.bf16.msra.mxu0 %v394
    %545 = vmatprep.subr.bf16.mxu0 %v399
    %546 = vmatpush1.bf16.msra.mxu0 %v398
    %547 = vmatprep.subr.bf16.mxu0 %v403
    %548 = vmatpush1.bf16.msra.mxu0 %v402
    %549 = vmatprep.subr.bf16.mxu0 %v407
    %550 = vmatpush1.bf16.msra.mxu0 %v406
    %551 = vmatprep.subr.bf16.mxu0 %v411
    %552 = vmatpush1.bf16.msra.mxu0 %v410
    %553 = vmatprep.subr.bf16.mxu0 %v415
    %554 = vmatpush1.bf16.msra.mxu0 %v414
    %555 = vmatprep.mubr.bf16.mxu0 %v95
    %556 = vmatmul.mubr.bf16.gmra.mrb[0].mxu0 %v94
    %v557 = vpop.f32.mrb[0].mxu0
    %v558 = vadd.f32 0.0, %v557
    %v559 = vpop.f32.mrb[0].mxu0
    %v560 = vadd.f32 0.0, %v559
    %v561 = vpop.f32.mrb[0].mxu0
    %v562 = vadd.f32 0.0, %v561
    %v563 = vpop.f32.mrb[0].mxu0
    %v564 = vadd.f32 0.0, %v563
    %565 = vdwg.mxu0
    %v566 = vld [vmem:[#allocation8] sm:$0xff]
    %v567 = vld [vmem:[#allocation8 + $0x8] sm:$0xff]
    %v568 = vmul.f32 %v515, 0.5
    %v569 = vmul.f32 %v517, 0.5
    %v570 = vmul.f32 %v519, 0.5
    %v571 = vmul.f32 %v521, 0.5
    %v572 = vtanh.pop %v568
    %v573 = vtanh.pop %v569
    %v574 = vtanh.pop %v570
    %v575 = vtanh.pop %v571
    %v576 = vmul.f32 %v572, 0.5
    %v577 = vmul.f32 %v573, 0.5
    %v578 = vmul.f32 %v574, 0.5
    %v579 = vmul.f32 %v575, 0.5
    %v580 = vadd.f32 %v576, 0.5
    %v581 = vadd.f32 %v577, 0.5
    %v582 = vadd.f32 %v578, 0.5
    %v583 = vadd.f32 %v579, 0.5
    %v584 = vtanh.pop %v558
    %v585 = vtanh.pop %v562
    %v586 = vmul.f32 %v560, 0.5
    %v587 = vmul.f32 %v564, 0.5
    %v588 = vtanh.pop %v586
    %v589 = vtanh.pop %v587
    %v590 = vmul.f32 %v588, 0.5
    %v591 = vmul.f32 %v589, 0.5
    %v592 = vadd.f32 %v590, 0.5
    %v593 = vadd.f32 %v591, 0.5
    %v594 = vmul.f32 %v581, %v566
    %v595 = vmul.f32 %v583, %v567
    %v596 = vmul.f32 %v580, %v584
    %v597 = vmul.f32 %v582, %v585
    %v598 = vadd.f32 %v594, %v596
    %v599 = vadd.f32 %v595, %v597
    %v600 = vtanh.pop %v598
    %v601 = vtanh.pop %v599
    %v602 = vmul.f32 %v592, %v600
    %v603 = vmul.f32 %v593, %v601
    %v604 = vpack.c.bf16 %v603, %v602
    %v606 = vunpack.c.l.b16 %v604
    %v607 = vunpack.c.h.b16 %v604
    %v608 = vpack.c.b16 %v606, %v606
    %v609 = vpack.c.b16 %v607, %v607
    %612 = vst [vmem:[#allocation11] sm:$0xf] %v608
    %613 = vst [vmem:[#allocation11 + $0x4] sm:$0xf] %v609
    %614 = vst [vmem:[#allocation12] sm:$0xff] %v598
    %615 = vst [vmem:[#allocation12 + $0x8] sm:$0xff] %v599
    // Predicated region
    $region34: #{tpu_custom_call.1} parent=1 // pred_check
      _
    $region35: #{tpu_custom_call.1} parent=1 // pred_check_branch
      %617 = sbr.rel (0) target = $region37
    $region36: #{tpu_custom_call.1} parent=1 // pred_region
      %s619 = ssub.s32 128, 128
      %620 = vsyncadd [#allocation5], %s619
      %s621 = sshll.u32 [#allocation11], 4
      %s622 = int_to_ptr.vmem [resolvable:$true] %s621
      %627 = dma.vmem_to_hbm [thread:$0]  %s622, 128, %s4, [#allocation5], 64, 64, 4
    $region37: #{tpu_custom_call.1} parent=1 // pred_fallthru
      _
    // Predicated region
    $region38: #{tpu_custom_call.1} parent=1 // pred_check
      _
    $region39: #{tpu_custom_call.1} parent=1 // pred_check_branch
      %629 = sbr.rel (0) target = $region41
    $region40: #{tpu_custom_call.1} parent=1 // pred_region
      %s631 = ssub.s32 256, 256
      %632 = vsyncadd [#allocation13], %s631
      %s633 = sshll.u32 [#allocation12], 4
      %s634 = int_to_ptr.vmem [resolvable:$true] %s633
      %639 = dma.vmem_to_hbm [thread:$0]  %s634, 256, %s5, [#allocation13], 128, 128, 8
    $region41: #{tpu_custom_call.1} parent=1 // pred_fallthru
      _
    // Predicated region
    $region42: #{tpu_custom_call.1} parent=1 // pred_check
      _
    $region43: #{tpu_custom_call.1} parent=1 // pred_check_branch
      %641 = sbr.rel (0) target = $region45
    $region44: #{tpu_custom_call.1} parent=1 // pred_region
      %642 = dma.done [#allocation5], 128
    $region45: #{tpu_custom_call.1} parent=1 // pred_fallthru
      _
    // Predicated region
    $region46: #{tpu_custom_call.1} parent=1 // pred_check
      _
    $region47: #{tpu_custom_call.1} parent=1 // pred_check_branch
      %644 = sbr.rel (0) target = $region49
    $region48: #{tpu_custom_call.1} parent=1 // pred_region
      %645 = dma.done [#allocation13], 256
    $region49: #{tpu_custom_call.1} parent=1 // pred_fallthru
      _
    %646 = vsyncpa [#allocation4], 1
    %647 = vsyncpa [#allocation7], 1
    %648 = vsyncpa [#allocation10], 1
    %649 = vsyncpa [#allocation5], 1
    %650 = vsyncpa [#allocation13], 1

</llo_original>
